<compile_context>
chip_gen: v5e
topology: v5e:2x2
jax: 0.10.0
libtpu: 0.0.40
codegen_flags: <defaults>
</compile_context>

<pallas_src>
import functools

import numpy as np

import jax
import jax.numpy as jnp
from jax import lax
from jax.experimental import pallas as pl
from jax.experimental.pallas import tpu as pltpu


# ------------------------------ helpers -------------------------------------

def _round_up(x, m):
    return ((x + m - 1) // m) * m


def _pad2(w, rows, cols):
    out = jnp.zeros((rows, cols), w.dtype)
    return out.at[: w.shape[0], : w.shape[1]].set(w)


def _pad_row(v, cols):
    v = v.reshape(1, -1)
    out = jnp.zeros((1, cols), v.dtype)
    return out.at[:, : v.shape[1]].set(v)


def _fold_bn(gamma, beta, rm, rv, c_pad, eps=1e-5):
    scale = gamma / jnp.sqrt(rv + eps)
    shift = beta - rm * scale
    return _pad_row(scale, c_pad), _pad_row(shift, c_pad)


def _vmem_limit_bytes():
    # Generation-aware scoped-VMEM cap: ~3/4 of physical (v7x 64 MiB -> 48 MiB,
    # v5e/v6e 128 MiB -> ~96 MiB).  The working set here is <= ~24 MiB, so the
    # cap only matters if tiles are enlarged further.
    try:
        cap = pltpu.get_tpu_info().vmem_capacity_bytes
        return int(min(cap * 3 // 4, 100 * 1024 * 1024))
    except Exception:
        return 48 * 1024 * 1024


def _pick_tiles(num_nodes):
    """Row tile (tm), k tile (tk) and padded node count.

    tk large (<=2048) to amortize the ~0.35us per-grid-step overhead and give
    long contiguous A DMA bursts; tm large (<=1024) to amortize P re-reads but
    small enough that the parallel row axis keeps >= 8 steps when the graph
    allows it (v7x megacore).  Zero-padding waste kept <= ~25%.
    """
    n128 = _round_up(max(num_nodes, 1), 128)

    def waste_ok(t):
        return _round_up(n128, t) - n128 <= n128 // 4

    tk = 128
    for cand in (256, 512, 1024, 2048):
        if cand <= n128 and waste_ok(cand):
            tk = cand
    tm = 128
    for cand in (256, 512, 1024):
        if cand <= n128 and n128 // cand >= 8 and waste_ok(max(cand, tk)):
            tm = cand
    n_pad = _round_up(n128, max(tm, tk))   # tm, tk are 128*2^j -> lcm == max
    return n_pad, tm, tk


# ---------------------- host-side graph preparation --------------------------

def prepare_graph(edge_index, num_nodes):
    """Dense int8 adjacency + per-row-tile nonzero k-block map.

    Host-side (numpy), run once per graph, OUTSIDE jit -- no per-forward XLA
    scatter and no f32 N^2 intermediate.
    """
    n_pad, tm, tk = _pick_tiles(num_nodes)
    ei = np.asarray(edge_index)
    src, dst = ei[0], ei[1]

    counts = np.zeros((n_pad, n_pad), np.int32)
    np.add.at(counts, (dst, src), 1)          # A[dst, src] += 1  (scatter-sum)
    # int8 is exact for per-pair edge multiplicities <= 127.
    # TODO(synk): heavier multigraph multiplicities are saturated at 127.
    a = np.minimum(counts, 127).astype(np.int8)

    num_i, num_k = n_pad // tm, n_pad // tk
    nz = (a != 0).reshape(num_i, tm, num_k, tk).any(axis=(1, 3))
    kcnt = nz.sum(axis=1).astype(np.int32)          # nonzero k-blocks per row tile
    max_nnz = max(int(kcnt.max()), 1)
    kidx = np.zeros((num_i, max_nnz), np.int32)
    for i in range(num_i):
        ks = np.flatnonzero(nz[i])
        if ks.size:
            kidx[i, : ks.size] = ks
            kidx[i, ks.size:] = ks[-1]   # repeat last valid block -> no extra DMA

    return dict(
        a=jnp.asarray(a),
        kidx=jnp.asarray(kidx.reshape(-1)),   # flat 1-D: avoids 2-D SMEM padding
        kcnt=jnp.asarray(kcnt),
        n_pad=n_pad, tm=tm, tk=tk, max_nnz=max_nnz,
    )


# -------- prologue kernel: [P | Q] = x @ [W_l | W_r] ; P->bf16, Q += bias -----

def _preproject_kernel(x_ref, w_ref, b_ref, p_ref, q_ref):
    pq = jnp.dot(x_ref[...], w_ref[...], preferred_element_type=jnp.float32)
    c = p_ref.shape[1]
    p_ref[...] = pq[:, :c].astype(p_ref.dtype)     # bf16: feeds the A @ P matmul
    q_ref[...] = pq[:, c:] + b_ref[...]            # f32 root/self term + bias


def preproject(x, w_cat, bias, *, tm):
    n_pad, f_pad = x.shape
    c_pad = w_cat.shape[1] // 2
    return pl.pallas_call(
        _preproject_kernel,
        out_shape=(jax.ShapeDtypeStruct((n_pad, c_pad), jnp.bfloat16),
                   jax.ShapeDtypeStruct((n_pad, c_pad), jnp.float32)),
        grid_spec=pltpu.PrefetchScalarGridSpec(
            num_scalar_prefetch=0,
            grid=(n_pad // tm,),
            in_specs=[
                pl.BlockSpec((tm, f_pad), lambda i: (i, 0)),         # x row tile
                pl.BlockSpec((f_pad, 2 * c_pad), lambda i: (0, 0)),  # [W_l | W_r]
                pl.BlockSpec((1, c_pad), lambda i: (0, 0)),          # bias row
            ],
            out_specs=(
                pl.BlockSpec((tm, c_pad), lambda i: (i, 0)),
                pl.BlockSpec((tm, c_pad), lambda i: (i, 0)),
            ),
        ),
        compiler_params=pltpu.CompilerParams(
            dimension_semantics=("parallel",),
            vmem_limit_bytes=_vmem_limit_bytes(),
        ),
    )(x, w_cat, bias)


# ----- main kernel: acc = Q + sum_k A_ik @ P_k ; epilogue L2-norm, BN, ReLU ---

def _agg_epilogue_kernel(kidx_ref, kcnt_ref, a_ref, p_ref, q_ref,
                         scale_ref, shift_ref, out_ref, acc_ref,
                         *, apply_relu: bool):
    i = pl.program_id(0)
    k = pl.program_id(1)

    @pl.when(k == 0)
    def _():
        acc_ref[...] = q_ref[...]                 # init with root/self + bias term

    # Skip compute for padded (beyond nonzero-count) k steps; their index_map
    # repeats the previous block index, so they also issue no new DMA.
    @pl.when(k < kcnt_ref[i])
    def _():
        # int8 A tile -> bf16 in-register (VPU, exact; via f32 for a robust
        # lowering); the MXU matmul itself runs bf16 x bf16 -> f32.
        a = a_ref[...].astype(jnp.float32).astype(jnp.bfloat16)
        acc_ref[...] += jnp.dot(a, p_ref[...],
                                preferred_element_type=jnp.float32)

    @pl.when(k == pl.num_programs(1) - 1)
    def _():
        h = acc_ref[...]
        # F.normalize(h, p=2, dim=-1): h / max(||h||, 1e-12)
        ss = jnp.sum(h * h, axis=-1, keepdims=True)
        h = h * lax.rsqrt(jnp.maximum(ss, 1e-24))
        # Folded BatchNorm1d (eval): one FMA per element.
        h = h * scale_ref[...] + shift_ref[...]
        if apply_relu:
            h = jnp.maximum(h, 0.0)
        out_ref[...] = h.astype(out_ref.dtype)


def sage_bn_layer(kidx, kcnt, a_i8, p, q, bn_scale, bn_shift, *,
                  tm, tk, max_nnz, apply_relu, out_dtype):
    n_pad = a_i8.shape[0]
    c_pad = p.shape[1]
    num_i = n_pad // tm

    def a_map(i, k, kidx_ref, kcnt_ref):          # data-dependent block skip
        return (i, kidx_ref[i * max_nnz + k])

    def p_map(i, k, kidx_ref, kcnt_ref):
        return (kidx_ref[i * max_nnz + k], 0)

    kernel = functools.partial(_agg_epilogue_kernel, apply_relu=apply_relu)
    return pl.pallas_call(
        kernel,
        out_shape=jax.ShapeDtypeStruct((n_pad, c_pad), out_dtype),
        grid_spec=pltpu.PrefetchScalarGridSpec(
            num_scalar_prefetch=2,                       # kidx, kcnt -> SMEM
            grid=(num_i, max_nnz),
            in_specs=[
                pl.BlockSpec((tm, tk), a_map),                        # int8 A tile
                pl.BlockSpec((tk, c_pad), p_map),                     # bf16 P tile
                pl.BlockSpec((tm, c_pad), lambda i, k, *_: (i, 0)),   # Q (resident)
                pl.BlockSpec((1, c_pad), lambda i, k, *_: (0, 0)),    # BN scale
                pl.BlockSpec((1, c_pad), lambda i, k, *_: (0, 0)),    # BN shift
            ],
            out_specs=pl.BlockSpec((tm, c_pad), lambda i, k, *_: (i, 0)),
            scratch_shapes=[pltpu.VMEM((tm, c_pad), jnp.float32)],
        ),
        compiler_params=pltpu.CompilerParams(
            dimension_semantics=("parallel", "arbitrary"),
            vmem_limit_bytes=_vmem_limit_bytes(),
        ),
    )(kidx, kcnt, a_i8, p, q, bn_scale, bn_shift)


# ------------------------------ full forward ---------------------------------

def init_params(key, in_channels, hidden_channels, out_channels):
    """Deterministic synthetic parameters (shapes match the torch module)."""
    ks = jax.random.split(key, 4)
    scale = 0.1

    def lin(k, fin, fout):
        # stored already transposed: (fin, fout) so kernels do x @ W
        return scale * jax.random.normal(k, (fin, fout), jnp.float32)

    return {
        "w1_l": lin(ks[0], in_channels, hidden_channels),
        "b1_l": jnp.zeros((hidden_channels,), jnp.float32),
        "w1_r": lin(ks[1], in_channels, hidden_channels),
        "w2_l": lin(ks[2], hidden_channels, out_channels),
        "b2_l": jnp.zeros((out_channels,), jnp.float32),
        "w2_r": lin(ks[3], hidden_channels, out_channels),
        "bn1_g": jnp.ones((hidden_channels,), jnp.float32),
        "bn1_b": jnp.zeros((hidden_channels,), jnp.float32),
        "bn1_rm": jnp.zeros((hidden_channels,), jnp.float32),
        "bn1_rv": jnp.ones((hidden_channels,), jnp.float32),
        "bn2_g": jnp.ones((out_channels,), jnp.float32),
        "bn2_b": jnp.zeros((out_channels,), jnp.float32),
        "bn2_rm": jnp.zeros((out_channels,), jnp.float32),
        "bn2_rv": jnp.ones((out_channels,), jnp.float32),
    }


def gnn_encoder_apply(params, x, a_i8, kidx, kcnt, *, tm, tk, max_nnz):
    n, fin = x.shape
    hid = params["w1_l"].shape[1]
    out_c = params["w2_l"].shape[1]
    n_pad = a_i8.shape[0]

    # lane-pad feature dims to 128 (unmasked stores, MXU-friendly)
    f_pad = _round_up(fin, 128)
    c1 = _round_up(hid, 128)
    c2 = _round_up(out_c, 128)

    # -------- layer 1: SAGEConv -> BN -> ReLU (Dropout == identity in eval) --
    xp = _pad2(x, n_pad, f_pad)
    w1 = jnp.concatenate([_pad2(params["w1_l"], f_pad, c1),
                          _pad2(params["w1_r"], f_pad, c1)], axis=1)
    b1 = _pad_row(params["b1_l"], c1)
    s1, t1 = _fold_bn(params["bn1_g"], params["bn1_b"],
                      params["bn1_rm"], params["bn1_rv"], c1)
    p1, q1 = preproject(xp, w1, b1, tm=tm)
    h = sage_bn_layer(kidx, kcnt, a_i8, p1, q1, s1, t1,
                      tm=tm, tk=tk, max_nnz=max_nnz,
                      apply_relu=True, out_dtype=jnp.bfloat16)

    # -------- layer 2: SAGEConv -> BN -----------------------------------------
    w2 = jnp.concatenate([_pad2(params["w2_l"], c1, c2),
                          _pad2(params["w2_r"], c1, c2)],
                         axis=1).astype(jnp.bfloat16)   # h is bf16
    b2 = _pad_row(params["b2_l"], c2)
    s2, t2 = _fold_bn(params["bn2_g"], params["bn2_b"],
                      params["bn2_rm"], params["bn2_rv"], c2)
    p2, q2 = preproject(h, w2, b2, tm=tm)
    out = sage_bn_layer(kidx, kcnt, a_i8, p2, q2, s2, t2,
                        tm=tm, tk=tk, max_nnz=max_nnz,
                        apply_relu=False, out_dtype=jnp.float32)

    return out[:n, :out_c]


def gnn_encoder_forward(params, x, edge_index):
    """Convenience wrapper matching the torch module signature."""
    g = prepare_graph(np.asarray(edge_index), x.shape[0])
    return gnn_encoder_apply(params, x, g["a"], g["kidx"], g["kcnt"],
                             tm=g["tm"], tk=g["tk"], max_nnz=g["max_nnz"])


if __name__ == "__main__":
    key = jax.random.PRNGKey(0)
    k_x, k_e, k_p = jax.random.split(key, 3)

    num_nodes = 16
    in_channels = 8
    hidden_channels = 32
    out_channels = 16
    num_edges = 48

    x = jax.random.normal(k_x, (num_nodes, in_channels), jnp.float32)
    edge_index = jax.random.randint(k_e, (2, num_edges), 0, num_nodes,
                                    dtype=jnp.int32)

    params = init_params(k_p, in_channels, hidden_channels, out_channels)

    # Graph structure prepared once, host-side, outside jit.
    g = prepare_graph(np.asarray(edge_index), num_nodes)
    fwd = jax.jit(functools.partial(gnn_encoder_apply,
                                    tm=g["tm"], tk=g["tk"], max_nnz=g["max_nnz"]))
    out = fwd(params, x, g["a"], g["kidx"], g["kcnt"])
    out = jax.block_until_ready(out)

    assert out.shape == (num_nodes, out_channels), out.shape
    assert bool(jnp.all(jnp.isfinite(out)))
    print("KERNEL_OK")
</pallas_src>

<mosaic_0001>
module attributes {stable_mosaic.version = 11 : i64} {
  func.func @_agg_epilogue_kernel(%arg0: i32, %arg1: i32, %arg2: memref<1xi32, #tpu.memory_space<smem>>, %arg3: memref<1xi32, #tpu.memory_space<smem>>, %arg4: memref<128x128xi8, #tpu.memory_space<vmem>>, %arg5: memref<128x128xbf16, #tpu.memory_space<vmem>>, %arg6: memref<128x128xf32, #tpu.memory_space<vmem>>, %arg7: memref<1x128xf32, #tpu.memory_space<vmem>>, %arg8: memref<1x128xf32, #tpu.memory_space<vmem>>, %arg9: memref<128x128xbf16, #tpu.memory_space<vmem>>, %arg10: memref<128x128xf32, #tpu.memory_space<vmem>>) attributes {dimension_semantics = [#tpu.dimension_semantics<parallel>, #tpu.dimension_semantics<arbitrary>], iteration_bounds = array<i64: 1, 1>, scalar_prefetch = 2 : i64, scratch_operands = 1 : i64, tpu.core_type = #tpu.core_type<tc>, window_params = [{transform_indices = @transform_0, window_bounds = array<i64: 128, 128>}, {transform_indices = @transform_1, window_bounds = array<i64: 128, 128>}, {transform_indices = @transform_2, window_bounds = array<i64: 128, 128>}, {pipeline_mode = #tpu.pipeline_mode<synchronous>, transform_indices = @transform_3, window_bounds = array<i64: 1, 128>}, {pipeline_mode = #tpu.pipeline_mode<synchronous>, transform_indices = @transform_4, window_bounds = array<i64: 1, 128>}, {transform_indices = @transform_5, window_bounds = array<i64: 128, 128>}]} {
    %c0_i32 = arith.constant 0 : i32
    %0 = arith.cmpi eq, %arg1, %c0_i32 : i32
    %1 = arith.extui %0 : i1 to i32
    %c0_i32_0 = arith.constant 0 : i32
    %2 = arith.cmpi ne, %1, %c0_i32_0 : i32
    scf.if %2 {
      %c0 = arith.constant 0 : index
      %c0_4 = arith.constant 0 : index
      %11 = vector.load %arg6[%c0, %c0_4] : memref<128x128xf32, #tpu.memory_space<vmem>>, vector<128x128xf32>
      %c0_5 = arith.constant 0 : index
      %c0_6 = arith.constant 0 : index
      %12 = vector.load %arg10[%c0_5, %c0_6] : memref<128x128xf32, #tpu.memory_space<vmem>>, vector<128x128xf32>
      tpu.vector_store %arg10[%c0_5, %c0_6], %11 {strides = array<i32>} : memref<128x128xf32, #tpu.memory_space<vmem>>, vector<128x128xf32>,
    } else {
    }
    %3 = arith.index_cast %arg0 : i32 to index
    %4 = memref.load %arg3[%3] : memref<1xi32, #tpu.memory_space<smem>>
    %5 = arith.cmpi slt, %arg1, %4 : i32
    %6 = arith.extui %5 : i1 to i32
    %c0_i32_1 = arith.constant 0 : i32
    %7 = arith.cmpi ne, %6, %c0_i32_1 : i32
    scf.if %7 {
      %c0 = arith.constant 0 : index
      %c0_4 = arith.constant 0 : index
      %11 = vector.load %arg4[%c0, %c0_4] : memref<128x128xi8, #tpu.memory_space<vmem>>, vector<128x128xi8>
      %12 = arith.sitofp %11 : vector<128x128xi8> to vector<128x128xf32>
      %13 = arith.truncf %12 : vector<128x128xf32> to vector<128x128xbf16>
      %c0_5 = arith.constant 0 : index
      %c0_6 = arith.constant 0 : index
      %14 = vector.load %arg10[%c0_5, %c0_6] : memref<128x128xf32, #tpu.memory_space<vmem>>, vector<128x128xf32>
      %c0_7 = arith.constant 0 : index
      %c0_8 = arith.constant 0 : index
      %15 = vector.load %arg5[%c0_7, %c0_8] : memref<128x128xbf16, #tpu.memory_space<vmem>>, vector<128x128xbf16>
      %cst = arith.constant dense<0.000000e+00> : vector<128x128xf32>
      %16 = tpu.matmul %13, %15, %cst {dimension_numbers = #tpu.dot_dimension_numbers<[1], [0], [0], [1], [0, 0, 1, 1], [], []>} : vector<128x128xbf16>, vector<128x128xbf16>, vector<128x128xf32> -> vector<128x128xf32>
      %17 = arith.addf %14, %16 : vector<128x128xf32>
      %c0_9 = arith.constant 0 : index
      %c0_10 = arith.constant 0 : index
      %18 = vector.load %arg10[%c0_9, %c0_10] : memref<128x128xf32, #tpu.memory_space<vmem>>, vector<128x128xf32>
      tpu.vector_store %arg10[%c0_9, %c0_10], %17 {strides = array<i32>} : memref<128x128xf32, #tpu.memory_space<vmem>>, vector<128x128xf32>,
    } else {
    }
    %c0_i32_2 = arith.constant 0 : i32
    %8 = arith.cmpi eq, %arg1, %c0_i32_2 : i32
    %9 = arith.extui %8 : i1 to i32
    %c0_i32_3 = arith.constant 0 : i32
    %10 = arith.cmpi ne, %9, %c0_i32_3 : i32
    scf.if %10 {
      %c0 = arith.constant 0 : index
      %c0_4 = arith.constant 0 : index
      %11 = vector.load %arg10[%c0, %c0_4] : memref<128x128xf32, #tpu.memory_space<vmem>>, vector<128x128xf32>
      %12 = arith.mulf %11, %11 : vector<128x128xf32>
      %cst = arith.constant dense<0.000000e+00> : vector<128xf32>
      %13 = vector.multi_reduction <add>, %12, %cst [1] : vector<128x128xf32> to vector<128xf32>
      %14 = vector.shape_cast %13 : vector<128xf32> to vector<128x1xf32>
      %cst_5 = arith.constant 1.000000e-24 : f32
      %15 = vector.broadcast %cst_5 : f32 to vector<128x1xf32>
      %16 = arith.maximumf %14, %15 : vector<128x1xf32>
      %17 = math.rsqrt %16 : vector<128x1xf32>
      %18 = vector.broadcast %17 : vector<128x1xf32> to vector<128x128xf32>
      %19 = arith.mulf %11, %18 : vector<128x128xf32>
      %c0_6 = arith.constant 0 : index
      %c0_7 = arith.constant 0 : index
      %20 = vector.load %arg7[%c0_6, %c0_7] : memref<1x128xf32, #tpu.memory_space<vmem>>, vector<1x128xf32>
      %21 = vector.broadcast %20 : vector<1x128xf32> to vector<128x128xf32>
      %22 = arith.mulf %19, %21 : vector<128x128xf32>
      %c0_8 = arith.constant 0 : index
      %c0_9 = arith.constant 0 : index
      %23 = vector.load %arg8[%c0_8, %c0_9] : memref<1x128xf32, #tpu.memory_space<vmem>>, vector<1x128xf32>
      %24 = vector.broadcast %23 : vector<1x128xf32> to vector<128x128xf32>
      %25 = arith.addf %22, %24 : vector<128x128xf32>
      %cst_10 = arith.constant 0.000000e+00 : f32
      %26 = vector.broadcast %cst_10 : f32 to vector<128x128xf32>
      %27 = arith.maximumf %25, %26 : vector<128x128xf32>
      %28 = arith.truncf %27 : vector<128x128xf32> to vector<128x128xbf16>
      %c0_11 = arith.constant 0 : index
      %c0_12 = arith.constant 0 : index
      %29 = vector.load %arg9[%c0_11, %c0_12] : memref<128x128xbf16, #tpu.memory_space<vmem>>, vector<128x128xbf16>
      tpu.vector_store %arg9[%c0_11, %c0_12], %28 {strides = array<i32>} : memref<128x128xbf16, #tpu.memory_space<vmem>>, vector<128x128xbf16>,
    } else {
    }
    return
  }
  func.func @transform_0(%arg0: i32, %arg1: i32, %arg2: memref<1xi32, #tpu.memory_space<smem>>, %arg3: memref<1xi32, #tpu.memory_space<smem>>) -> (i32, i32) {
    %c1_i32 = arith.constant 1 : i32
    %0 = arith.muli %arg0, %c1_i32 : i32
    %1 = arith.addi %0, %arg1 : i32
    %2 = arith.index_cast %1 : i32 to index
    %3 = memref.load %arg2[%2] : memref<1xi32, #tpu.memory_space<smem>>
    %c0_i32 = arith.constant 0 : i32
    return %arg0, %3 : i32, i32
  }
  func.func @transform_1(%arg0: i32, %arg1: i32, %arg2: memref<1xi32, #tpu.memory_space<smem>>, %arg3: memref<1xi32, #tpu.memory_space<smem>>) -> (i32, i32) {
    %c1_i32 = arith.constant 1 : i32
    %0 = arith.muli %arg0, %c1_i32 : i32
    %1 = arith.addi %0, %arg1 : i32
    %2 = arith.index_cast %1 : i32 to index
    %3 = memref.load %arg2[%2] : memref<1xi32, #tpu.memory_space<smem>>
    %c0_i32 = arith.constant 0 : i32
    %c0_i32_0 = arith.constant 0 : i32
    return %3, %c0_i32 : i32, i32
  }
  func.func @transform_2(%arg0: i32, %arg1: i32, %arg2: memref<1xi32, #tpu.memory_space<smem>>, %arg3: memref<1xi32, #tpu.memory_space<smem>>) -> (i32, i32) {
    %c0_i32 = arith.constant 0 : i32
    %c0_i32_0 = arith.constant 0 : i32
    return %arg0, %c0_i32 : i32, i32
  }
  func.func @transform_3(%arg0: i32, %arg1: i32, %arg2: memref<1xi32, #tpu.memory_space<smem>>, %arg3: memref<1xi32, #tpu.memory_space<smem>>) -> (i32, i32) {
    %c0_i32 = arith.constant 0 : i32
    %c0_i32_0 = arith.constant 0 : i32
    %c0_i32_1 = arith.constant 0 : i32
    return %c0_i32, %c0_i32_0 : i32, i32
  }
  func.func @transform_4(%arg0: i32, %arg1: i32, %arg2: memref<1xi32, #tpu.memory_space<smem>>, %arg3: memref<1xi32, #tpu.memory_space<smem>>) -> (i32, i32) {
    %c0_i32 = arith.constant 0 : i32
    %c0_i32_0 = arith.constant 0 : i32
    %c0_i32_1 = arith.constant 0 : i32
    return %c0_i32, %c0_i32_0 : i32, i32
  }
  func.func @transform_5(%arg0: i32, %arg1: i32, %arg2: memref<1xi32, #tpu.memory_space<smem>>, %arg3: memref<1xi32, #tpu.memory_space<smem>>) -> (i32, i32) {
    %c0_i32 = arith.constant 0 : i32
    %c0_i32_0 = arith.constant 0 : i32
    return %arg0, %c0_i32 : i32, i32
  }
}

module attributes {stable_mosaic.version = 11 : i64} {
  func.func @_preproject_kernel(%arg0: i32, %arg1: memref<128x128xf32, #tpu.memory_space<vmem>>, %arg2: memref<128x256xf32, #tpu.memory_space<vmem>>, %arg3: memref<1x128xf32, #tpu.memory_space<vmem>>, %arg4: memref<128x128xbf16, #tpu.memory_space<vmem>>, %arg5: memref<128x128xf32, #tpu.memory_space<vmem>>) attributes {dimension_semantics = [#tpu.dimension_semantics<parallel>], iteration_bounds = array<i64: 1>, scalar_prefetch = 0 : i64, scratch_operands = 0 : i64, tpu.core_type = #tpu.core_type<tc>, window_params = [{transform_indices = @transform_0, window_bounds = array<i64: 128, 128>}, {pipeline_mode = #tpu.pipeline_mode<synchronous>, transform_indices = @transform_1, window_bounds = array<i64: 128, 256>}, {pipeline_mode = #tpu.pipeline_mode<synchronous>, transform_indices = @transform_2, window_bounds = array<i64: 1, 128>}, {transform_indices = @transform_3, window_bounds = array<i64: 128, 128>}, {transform_indices = @transform_4, window_bounds = array<i64: 128, 128>}]} {
    %c0 = arith.constant 0 : index
    %c0_0 = arith.constant 0 : index
    %0 = vector.load %arg1[%c0, %c0_0] : memref<128x128xf32, #tpu.memory_space<vmem>>, vector<128x128xf32>
    %c0_1 = arith.constant 0 : index
    %c0_2 = arith.constant 0 : index
    %1 = vector.load %arg2[%c0_1, %c0_2] : memref<128x256xf32, #tpu.memory_space<vmem>>, vector<128x256xf32>
    %cst = arith.constant dense<0.000000e+00> : vector<128x256xf32>
    %2 = tpu.matmul %0, %1, %cst {dimension_numbers = #tpu.dot_dimension_numbers<[1], [0], [0], [1], [0, 0, 1, 1], [], []>} : vector<128x128xf32>, vector<128x256xf32>, vector<128x256xf32> -> vector<128x256xf32>
    %3 = vector.extract_strided_slice %2 {offsets = [0, 0], sizes = [128, 128], strides = [1, 1]} : vector<128x256xf32> to vector<128x128xf32>
    %4 = arith.truncf %3 : vector<128x128xf32> to vector<128x128xbf16>
    %c0_3 = arith.constant 0 : index
    %c0_4 = arith.constant 0 : index
    %5 = vector.load %arg4[%c0_3, %c0_4] : memref<128x128xbf16, #tpu.memory_space<vmem>>, vector<128x128xbf16>
    tpu.vector_store %arg4[%c0_3, %c0_4], %4 {strides = array<i32>} : memref<128x128xbf16, #tpu.memory_space<vmem>>, vector<128x128xbf16>,
    %6 = vector.extract_strided_slice %2 {offsets = [0, 128], sizes = [128, 128], strides = [1, 1]} : vector<128x256xf32> to vector<128x128xf32>
    %c0_5 = arith.constant 0 : index
    %c0_6 = arith.constant 0 : index
    %7 = vector.load %arg3[%c0_5, %c0_6] : memref<1x128xf32, #tpu.memory_space<vmem>>, vector<1x128xf32>
    %8 = vector.broadcast %7 : vector<1x128xf32> to vector<128x128xf32>
    %9 = arith.addf %6, %8 : vector<128x128xf32>
    %c0_7 = arith.constant 0 : index
    %c0_8 = arith.constant 0 : index
    %10 = vector.load %arg5[%c0_7, %c0_8] : memref<128x128xf32, #tpu.memory_space<vmem>>, vector<128x128xf32>
    tpu.vector_store %arg5[%c0_7, %c0_8], %9 {strides = array<i32>} : memref<128x128xf32, #tpu.memory_space<vmem>>, vector<128x128xf32>,
    return
  }
  func.func @transform_0(%arg0: i32) -> (i32, i32) {
    %c0_i32 = arith.constant 0 : i32
    %c0_i32_0 = arith.constant 0 : i32
    return %arg0, %c0_i32 : i32, i32
  }
  func.func @transform_1(%arg0: i32) -> (i32, i32) {
    %c0_i32 = arith.constant 0 : i32
    %c0_i32_0 = arith.constant 0 : i32
    %c0_i32_1 = arith.constant 0 : i32
    return %c0_i32, %c0_i32_0 : i32, i32
  }
  func.func @transform_2(%arg0: i32) -> (i32, i32) {
    %c0_i32 = arith.constant 0 : i32
    %c0_i32_0 = arith.constant 0 : i32
    %c0_i32_1 = arith.constant 0 : i32
    return %c0_i32, %c0_i32_0 : i32, i32
  }
  func.func @transform_3(%arg0: i32) -> (i32, i32) {
    %c0_i32 = arith.constant 0 : i32
    %c0_i32_0 = arith.constant 0 : i32
    return %arg0, %c0_i32 : i32, i32
  }
  func.func @transform_4(%arg0: i32) -> (i32, i32) {
    %c0_i32 = arith.constant 0 : i32
    %c0_i32_0 = arith.constant 0 : i32
    return %arg0, %c0_i32 : i32, i32
  }
}

module attributes {stable_mosaic.version = 11 : i64} {
  func.func @_preproject_kernel(%arg0: i32, %arg1: memref<128x128xbf16, #tpu.memory_space<vmem>>, %arg2: memref<128x256xbf16, #tpu.memory_space<vmem>>, %arg3: memref<1x128xf32, #tpu.memory_space<vmem>>, %arg4: memref<128x128xbf16, #tpu.memory_space<vmem>>, %arg5: memref<128x128xf32, #tpu.memory_space<vmem>>) attributes {dimension_semantics = [#tpu.dimension_semantics<parallel>], iteration_bounds = array<i64: 1>, scalar_prefetch = 0 : i64, scratch_operands = 0 : i64, tpu.core_type = #tpu.core_type<tc>, window_params = [{transform_indices = @transform_0, window_bounds = array<i64: 128, 128>}, {pipeline_mode = #tpu.pipeline_mode<synchronous>, transform_indices = @transform_1, window_bounds = array<i64: 128, 256>}, {pipeline_mode = #tpu.pipeline_mode<synchronous>, transform_indices = @transform_2, window_bounds = array<i64: 1, 128>}, {transform_indices = @transform_3, window_bounds = array<i64: 128, 128>}, {transform_indices = @transform_4, window_bounds = array<i64: 128, 128>}]} {
    %c0 = arith.constant 0 : index
    %c0_0 = arith.constant 0 : index
    %0 = vector.load %arg1[%c0, %c0_0] : memref<128x128xbf16, #tpu.memory_space<vmem>>, vector<128x128xbf16>
    %c0_1 = arith.constant 0 : index
    %c0_2 = arith.constant 0 : index
    %1 = vector.load %arg2[%c0_1, %c0_2] : memref<128x256xbf16, #tpu.memory_space<vmem>>, vector<128x256xbf16>
    %cst = arith.constant dense<0.000000e+00> : vector<128x256xf32>
    %2 = tpu.matmul %0, %1, %cst {dimension_numbers = #tpu.dot_dimension_numbers<[1], [0], [0], [1], [0, 0, 1, 1], [], []>} : vector<128x128xbf16>, vector<128x256xbf16>, vector<128x256xf32> -> vector<128x256xf32>
    %3 = vector.extract_strided_slice %2 {offsets = [0, 0], sizes = [128, 128], strides = [1, 1]} : vector<128x256xf32> to vector<128x128xf32>
    %4 = arith.truncf %3 : vector<128x128xf32> to vector<128x128xbf16>
    %c0_3 = arith.constant 0 : index
    %c0_4 = arith.constant 0 : index
    %5 = vector.load %arg4[%c0_3, %c0_4] : memref<128x128xbf16, #tpu.memory_space<vmem>>, vector<128x128xbf16>
    tpu.vector_store %arg4[%c0_3, %c0_4], %4 {strides = array<i32>} : memref<128x128xbf16, #tpu.memory_space<vmem>>, vector<128x128xbf16>,
    %6 = vector.extract_strided_slice %2 {offsets = [0, 128], sizes = [128, 128], strides = [1, 1]} : vector<128x256xf32> to vector<128x128xf32>
    %c0_5 = arith.constant 0 : index
    %c0_6 = arith.constant 0 : index
    %7 = vector.load %arg3[%c0_5, %c0_6] : memref<1x128xf32, #tpu.memory_space<vmem>>, vector<1x128xf32>
    %8 = vector.broadcast %7 : vector<1x128xf32> to vector<128x128xf32>
    %9 = arith.addf %6, %8 : vector<128x128xf32>
    %c0_7 = arith.constant 0 : index
    %c0_8 = arith.constant 0 : index
    %10 = vector.load %arg5[%c0_7, %c0_8] : memref<128x128xf32, #tpu.memory_space<vmem>>, vector<128x128xf32>
    tpu.vector_store %arg5[%c0_7, %c0_8], %9 {strides = array<i32>} : memref<128x128xf32, #tpu.memory_space<vmem>>, vector<128x128xf32>,
    return
  }
  func.func @transform_0(%arg0: i32) -> (i32, i32) {
    %c0_i32 = arith.constant 0 : i32
    %c0_i32_0 = arith.constant 0 : i32
    return %arg0, %c0_i32 : i32, i32
  }
  func.func @transform_1(%arg0: i32) -> (i32, i32) {
    %c0_i32 = arith.constant 0 : i32
    %c0_i32_0 = arith.constant 0 : i32
    %c0_i32_1 = arith.constant 0 : i32
    return %c0_i32, %c0_i32_0 : i32, i32
  }
  func.func @transform_2(%arg0: i32) -> (i32, i32) {
    %c0_i32 = arith.constant 0 : i32
    %c0_i32_0 = arith.constant 0 : i32
    %c0_i32_1 = arith.constant 0 : i32
    return %c0_i32, %c0_i32_0 : i32, i32
  }
  func.func @transform_3(%arg0: i32) -> (i32, i32) {
    %c0_i32 = arith.constant 0 : i32
    %c0_i32_0 = arith.constant 0 : i32
    return %arg0, %c0_i32 : i32, i32
  }
  func.func @transform_4(%arg0: i32) -> (i32, i32) {
    %c0_i32 = arith.constant 0 : i32
    %c0_i32_0 = arith.constant 0 : i32
    return %arg0, %c0_i32 : i32, i32
  }
}

module attributes {stable_mosaic.version = 11 : i64} {
  func.func @_agg_epilogue_kernel(%arg0: i32, %arg1: i32, %arg2: memref<1xi32, #tpu.memory_space<smem>>, %arg3: memref<1xi32, #tpu.memory_space<smem>>, %arg4: memref<128x128xi8, #tpu.memory_space<vmem>>, %arg5: memref<128x128xbf16, #tpu.memory_space<vmem>>, %arg6: memref<128x128xf32, #tpu.memory_space<vmem>>, %arg7: memref<1x128xf32, #tpu.memory_space<vmem>>, %arg8: memref<1x128xf32, #tpu.memory_space<vmem>>, %arg9: memref<128x128xf32, #tpu.memory_space<vmem>>, %arg10: memref<128x128xf32, #tpu.memory_space<vmem>>) attributes {dimension_semantics = [#tpu.dimension_semantics<parallel>, #tpu.dimension_semantics<arbitrary>], iteration_bounds = array<i64: 1, 1>, scalar_prefetch = 2 : i64, scratch_operands = 1 : i64, tpu.core_type = #tpu.core_type<tc>, window_params = [{transform_indices = @transform_0, window_bounds = array<i64: 128, 128>}, {transform_indices = @transform_1, window_bounds = array<i64: 128, 128>}, {transform_indices = @transform_2, window_bounds = array<i64: 128, 128>}, {pipeline_mode = #tpu.pipeline_mode<synchronous>, transform_indices = @transform_3, window_bounds = array<i64: 1, 128>}, {pipeline_mode = #tpu.pipeline_mode<synchronous>, transform_indices = @transform_4, window_bounds = array<i64: 1, 128>}, {transform_indices = @transform_5, window_bounds = array<i64: 128, 128>}]} {
    %c0_i32 = arith.constant 0 : i32
    %0 = arith.cmpi eq, %arg1, %c0_i32 : i32
    %1 = arith.extui %0 : i1 to i32
    %c0_i32_0 = arith.constant 0 : i32
    %2 = arith.cmpi ne, %1, %c0_i32_0 : i32
    scf.if %2 {
      %c0 = arith.constant 0 : index
      %c0_4 = arith.constant 0 : index
      %11 = vector.load %arg6[%c0, %c0_4] : memref<128x128xf32, #tpu.memory_space<vmem>>, vector<128x128xf32>
      %c0_5 = arith.constant 0 : index
      %c0_6 = arith.constant 0 : index
      %12 = vector.load %arg10[%c0_5, %c0_6] : memref<128x128xf32, #tpu.memory_space<vmem>>, vector<128x128xf32>
      tpu.vector_store %arg10[%c0_5, %c0_6], %11 {strides = array<i32>} : memref<128x128xf32, #tpu.memory_space<vmem>>, vector<128x128xf32>,
    } else {
    }
    %3 = arith.index_cast %arg0 : i32 to index
    %4 = memref.load %arg3[%3] : memref<1xi32, #tpu.memory_space<smem>>
    %5 = arith.cmpi slt, %arg1, %4 : i32
    %6 = arith.extui %5 : i1 to i32
    %c0_i32_1 = arith.constant 0 : i32
    %7 = arith.cmpi ne, %6, %c0_i32_1 : i32
    scf.if %7 {
      %c0 = arith.constant 0 : index
      %c0_4 = arith.constant 0 : index
      %11 = vector.load %arg4[%c0, %c0_4] : memref<128x128xi8, #tpu.memory_space<vmem>>, vector<128x128xi8>
      %12 = arith.sitofp %11 : vector<128x128xi8> to vector<128x128xf32>
      %13 = arith.truncf %12 : vector<128x128xf32> to vector<128x128xbf16>
      %c0_5 = arith.constant 0 : index
      %c0_6 = arith.constant 0 : index
      %14 = vector.load %arg10[%c0_5, %c0_6] : memref<128x128xf32, #tpu.memory_space<vmem>>, vector<128x128xf32>
      %c0_7 = arith.constant 0 : index
      %c0_8 = arith.constant 0 : index
      %15 = vector.load %arg5[%c0_7, %c0_8] : memref<128x128xbf16, #tpu.memory_space<vmem>>, vector<128x128xbf16>
      %cst = arith.constant dense<0.000000e+00> : vector<128x128xf32>
      %16 = tpu.matmul %13, %15, %cst {dimension_numbers = #tpu.dot_dimension_numbers<[1], [0], [0], [1], [0, 0, 1, 1], [], []>} : vector<128x128xbf16>, vector<128x128xbf16>, vector<128x128xf32> -> vector<128x128xf32>
      %17 = arith.addf %14, %16 : vector<128x128xf32>
      %c0_9 = arith.constant 0 : index
      %c0_10 = arith.constant 0 : index
      %18 = vector.load %arg10[%c0_9, %c0_10] : memref<128x128xf32, #tpu.memory_space<vmem>>, vector<128x128xf32>
      tpu.vector_store %arg10[%c0_9, %c0_10], %17 {strides = array<i32>} : memref<128x128xf32, #tpu.memory_space<vmem>>, vector<128x128xf32>,
    } else {
    }
    %c0_i32_2 = arith.constant 0 : i32
    %8 = arith.cmpi eq, %arg1, %c0_i32_2 : i32
    %9 = arith.extui %8 : i1 to i32
    %c0_i32_3 = arith.constant 0 : i32
    %10 = arith.cmpi ne, %9, %c0_i32_3 : i32
    scf.if %10 {
      %c0 = arith.constant 0 : index
      %c0_4 = arith.constant 0 : index
      %11 = vector.load %arg10[%c0, %c0_4] : memref<128x128xf32, #tpu.memory_space<vmem>>, vector<128x128xf32>
      %12 = arith.mulf %11, %11 : vector<128x128xf32>
      %cst = arith.constant dense<0.000000e+00> : vector<128xf32>
      %13 = vector.multi_reduction <add>, %12, %cst [1] : vector<128x128xf32> to vector<128xf32>
      %14 = vector.shape_cast %13 : vector<128xf32> to vector<128x1xf32>
      %cst_5 = arith.constant 1.000000e-24 : f32
      %15 = vector.broadcast %cst_5 : f32 to vector<128x1xf32>
      %16 = arith.maximumf %14, %15 : vector<128x1xf32>
      %17 = math.rsqrt %16 : vector<128x1xf32>
      %18 = vector.broadcast %17 : vector<128x1xf32> to vector<128x128xf32>
      %19 = arith.mulf %11, %18 : vector<128x128xf32>
      %c0_6 = arith.constant 0 : index
      %c0_7 = arith.constant 0 : index
      %20 = vector.load %arg7[%c0_6, %c0_7] : memref<1x128xf32, #tpu.memory_space<vmem>>, vector<1x128xf32>
      %21 = vector.broadcast %20 : vector<1x128xf32> to vector<128x128xf32>
      %22 = arith.mulf %19, %21 : vector<128x128xf32>
      %c0_8 = arith.constant 0 : index
      %c0_9 = arith.constant 0 : index
      %23 = vector.load %arg8[%c0_8, %c0_9] : memref<1x128xf32, #tpu.memory_space<vmem>>, vector<1x128xf32>
      %24 = vector.broadcast %23 : vector<1x128xf32> to vector<128x128xf32>
      %25 = arith.addf %22, %24 : vector<128x128xf32>
      %c0_10 = arith.constant 0 : index
      %c0_11 = arith.constant 0 : index
      %26 = vector.load %arg9[%c0_10, %c0_11] : memref<128x128xf32, #tpu.memory_space<vmem>>, vector<128x128xf32>
      tpu.vector_store %arg9[%c0_10, %c0_11], %25 {strides = array<i32>} : memref<128x128xf32, #tpu.memory_space<vmem>>, vector<128x128xf32>,
    } else {
    }
    return
  }
  func.func @transform_0(%arg0: i32, %arg1: i32, %arg2: memref<1xi32, #tpu.memory_space<smem>>, %arg3: memref<1xi32, #tpu.memory_space<smem>>) -> (i32, i32) {
    %c1_i32 = arith.constant 1 : i32
    %0 = arith.muli %arg0, %c1_i32 : i32
    %1 = arith.addi %0, %arg1 : i32
    %2 = arith.index_cast %1 : i32 to index
    %3 = memref.load %arg2[%2] : memref<1xi32, #tpu.memory_space<smem>>
    %c0_i32 = arith.constant 0 : i32
    return %arg0, %3 : i32, i32
  }
  func.func @transform_1(%arg0: i32, %arg1: i32, %arg2: memref<1xi32, #tpu.memory_space<smem>>, %arg3: memref<1xi32, #tpu.memory_space<smem>>) -> (i32, i32) {
    %c1_i32 = arith.constant 1 : i32
    %0 = arith.muli %arg0, %c1_i32 : i32
    %1 = arith.addi %0, %arg1 : i32
    %2 = arith.index_cast %1 : i32 to index
    %3 = memref.load %arg2[%2] : memref<1xi32, #tpu.memory_space<smem>>
    %c0_i32 = arith.constant 0 : i32
    %c0_i32_0 = arith.constant 0 : i32
    return %3, %c0_i32 : i32, i32
  }
  func.func @transform_2(%arg0: i32, %arg1: i32, %arg2: memref<1xi32, #tpu.memory_space<smem>>, %arg3: memref<1xi32, #tpu.memory_space<smem>>) -> (i32, i32) {
    %c0_i32 = arith.constant 0 : i32
    %c0_i32_0 = arith.constant 0 : i32
    return %arg0, %c0_i32 : i32, i32
  }
  func.func @transform_3(%arg0: i32, %arg1: i32, %arg2: memref<1xi32, #tpu.memory_space<smem>>, %arg3: memref<1xi32, #tpu.memory_space<smem>>) -> (i32, i32) {
    %c0_i32 = arith.constant 0 : i32
    %c0_i32_0 = arith.constant 0 : i32
    %c0_i32_1 = arith.constant 0 : i32
    return %c0_i32, %c0_i32_0 : i32, i32
  }
  func.func @transform_4(%arg0: i32, %arg1: i32, %arg2: memref<1xi32, #tpu.memory_space<smem>>, %arg3: memref<1xi32, #tpu.memory_space<smem>>) -> (i32, i32) {
    %c0_i32 = arith.constant 0 : i32
    %c0_i32_0 = arith.constant 0 : i32
    %c0_i32_1 = arith.constant 0 : i32
    return %c0_i32, %c0_i32_0 : i32, i32
  }
  func.func @transform_5(%arg0: i32, %arg1: i32, %arg2: memref<1xi32, #tpu.memory_space<smem>>, %arg3: memref<1xi32, #tpu.memory_space<smem>>) -> (i32, i32) {
    %c0_i32 = arith.constant 0 : i32
    %c0_i32_0 = arith.constant 0 : i32
    return %arg0, %c0_i32 : i32, i32
  }
}

</mosaic_0001>

<llo_original>
// kernel: gnn_encoder_apply.4
$region0: #{gnn_encoder_apply.4}
  #allocation0 [shape = 'u32[]', space=smem, size = 0x4, offset = 0x4, fixed_abs, tag = 'smem constant byte address 0x4 - core index']
  #allocation1 [shape = 'u32[72,128]{1,0:T(1,128)}', space=vmem, size = 0x9000, scoped, tag = 'internal scratch']
  %s0 = inlined_call_operand.vmem [shape: f32[128,128], index: 0, kind: input, shape index: {}]
  %s1 = inlined_call_operand.vmem [shape: f32[128,256], index: 1, kind: input, shape index: {}]
  %s2 = inlined_call_operand.vmem [shape: f32[1,128], index: 2, kind: input, shape index: {}]
  %s3 = inlined_call_operand.vmem [shape: bf16[128,128], index: 3, kind: output, shape index: {0}]
  %s4 = inlined_call_operand.vmem [shape: f32[128,128], index: 4, kind: output, shape index: {1}]
  %5 = xla_tuple %s3, %s4
  %s6 = sld [smem:[#allocation0]]
  $region30: #{gnn_encoder_apply.4} parent=0
    _
  %s8 = ssub.s32 1, %s6
  %s9 = scalar_select 0, %s8, %s6
  // Predicated region
  $region2: #{gnn_encoder_apply.4} parent=0 // pred_check
    _
  $region3: #{gnn_encoder_apply.4} parent=0 // pred_check_branch
    %11 = sbr.rel (0) target = $region5
  $region4: #{gnn_encoder_apply.4} parent=0 // pred_region
    _
  $region5: #{gnn_encoder_apply.4} parent=0 // pred_fallthru
    _
  // Predicated region
  $region6: #{gnn_encoder_apply.4} parent=0 // pred_check
    _
  $region7: #{gnn_encoder_apply.4} parent=0 // pred_check_branch
    %13 = sbr.rel (0) target = $region9
  $region8: #{gnn_encoder_apply.4} parent=0 // pred_region
    _
  $region9: #{gnn_encoder_apply.4} parent=0 // pred_fallthru
    _
  // Predicated region
  $region10: #{gnn_encoder_apply.4} parent=0 // pred_check
    _
  $region11: #{gnn_encoder_apply.4} parent=0 // pred_check_branch
    %15 = sbr.rel (0) target = $region13
  $region12: #{gnn_encoder_apply.4} parent=0 // pred_region
    _
  $region13: #{gnn_encoder_apply.4} parent=0 // pred_fallthru
    _
  %v16 = vld [vmem:[%s0] sm:$0xff]
  %v17 = vld [vmem:[%s0 + $0x8] sm:$0xff]
  %v18 = vld [vmem:[%s0 + $0x10] sm:$0xff]
  %v19 = vld [vmem:[%s0 + $0x18] sm:$0xff]
  %v20 = vld [vmem:[%s0 + $0x20] sm:$0xff]
  %v21 = vld [vmem:[%s0 + $0x28] sm:$0xff]
  %v22 = vld [vmem:[%s0 + $0x30] sm:$0xff]
  %v23 = vld [vmem:[%s0 + $0x38] sm:$0xff]
  %v24 = vld [vmem:[%s0 + $0x40] sm:$0xff]
  %v25 = vld [vmem:[%s0 + $0x48] sm:$0xff]
  %v26 = vld [vmem:[%s0 + $0x50] sm:$0xff]
  %v27 = vld [vmem:[%s0 + $0x58] sm:$0xff]
  %v28 = vld [vmem:[%s0 + $0x60] sm:$0xff]
  %v29 = vld [vmem:[%s0 + $0x68] sm:$0xff]
  %v30 = vld [vmem:[%s0 + $0x70] sm:$0xff]
  %v31 = vld [vmem:[%s0 + $0x78] sm:$0xff]
  %v32 = vld [vmem:[%s1] sm:$0xff]
  %v33 = vld [vmem:[%s1 + $0x8] sm:$0xff]
  %v34 = vld [vmem:[%s1 + $0x10] sm:$0xff]
  %v35 = vld [vmem:[%s1 + $0x18] sm:$0xff]
  %v36 = vld [vmem:[%s1 + $0x20] sm:$0xff]
  %v37 = vld [vmem:[%s1 + $0x28] sm:$0xff]
  %v38 = vld [vmem:[%s1 + $0x30] sm:$0xff]
  %v39 = vld [vmem:[%s1 + $0x38] sm:$0xff]
  %v40 = vld [vmem:[%s1 + $0x40] sm:$0xff]
  %v41 = vld [vmem:[%s1 + $0x48] sm:$0xff]
  %v42 = vld [vmem:[%s1 + $0x50] sm:$0xff]
  %v43 = vld [vmem:[%s1 + $0x58] sm:$0xff]
  %v44 = vld [vmem:[%s1 + $0x60] sm:$0xff]
  %v45 = vld [vmem:[%s1 + $0x68] sm:$0xff]
  %v46 = vld [vmem:[%s1 + $0x70] sm:$0xff]
  %v47 = vld [vmem:[%s1 + $0x78] sm:$0xff]
  %v48 = vld [vmem:[%s1 + $0x80] sm:$0xff]
  %v49 = vld [vmem:[%s1 + $0x88] sm:$0xff]
  %v50 = vld [vmem:[%s1 + $0x90] sm:$0xff]
  %v51 = vld [vmem:[%s1 + $0x98] sm:$0xff]
  %v52 = vld [vmem:[%s1 + $0xa0] sm:$0xff]
  %v53 = vld [vmem:[%s1 + $0xa8] sm:$0xff]
  %v54 = vld [vmem:[%s1 + $0xb0] sm:$0xff]
  %v55 = vld [vmem:[%s1 + $0xb8] sm:$0xff]
  %v56 = vld [vmem:[%s1 + $0xc0] sm:$0xff]
  %v57 = vld [vmem:[%s1 + $0xc8] sm:$0xff]
  %v58 = vld [vmem:[%s1 + $0xd0] sm:$0xff]
  %v59 = vld [vmem:[%s1 + $0xd8] sm:$0xff]
  %v60 = vld [vmem:[%s1 + $0xe0] sm:$0xff]
  %v61 = vld [vmem:[%s1 + $0xe8] sm:$0xff]
  %v62 = vld [vmem:[%s1 + $0xf0] sm:$0xff]
  %v63 = vld [vmem:[%s1 + $0xf8] sm:$0xff]
  %64 = vmatpush.msra.mxu0 %v62
  %65 = vmatpush.msra.mxu0 %v60
  %66 = vmatpush.msra.mxu0 %v58
  %67 = vmatpush.msra.mxu0 %v56
  %68 = vmatpush.msra.mxu0 %v54
  %69 = vmatpush.msra.mxu0 %v52
  %70 = vmatpush.msra.mxu0 %v50
  %71 = vmatpush.msra.mxu0 %v48
  %72 = vmatpush.msra.mxu0 %v46
  %73 = vmatpush.msra.mxu0 %v44
  %74 = vmatpush.msra.mxu0 %v42
  %75 = vmatpush.msra.mxu0 %v40
  %76 = vmatpush.msra.mxu0 %v38
  %77 = vmatpush.msra.mxu0 %v36
  %78 = vmatpush.msra.mxu0 %v34
  %79 = vmatpush.msra.mxu0 %v32
  %80 = vmatmul.f32.gmra.mxu0 %v16
  %v81 = vpop.f32.mrf.mxu0
  %v82 = vadd.f32 0.0, %v81
  %83 = vmatmul.f32.gmra.mxu0 %v17
  %v84 = vpop.f32.mrf.mxu0
  %v85 = vadd.f32 0.0, %v84
  %86 = vmatmul.f32.gmra.mxu0 %v18
  %v87 = vpop.f32.mrf.mxu0
  %v88 = vadd.f32 0.0, %v87
  %89 = vmatmul.f32.gmra.mxu0 %v19
  %v90 = vpop.f32.mrf.mxu0
  %v91 = vadd.f32 0.0, %v90
  %92 = vmatmul.f32.gmra.mxu0 %v20
  %v93 = vpop.f32.mrf.mxu0
  %v94 = vadd.f32 0.0, %v93
  %95 = vmatmul.f32.gmra.mxu0 %v21
  %v96 = vpop.f32.mrf.mxu0
  %v97 = vadd.f32 0.0, %v96
  %98 = vmatmul.f32.gmra.mxu0 %v22
  %v99 = vpop.f32.mrf.mxu0
  %v100 = vadd.f32 0.0, %v99
  %101 = vmatmul.f32.gmra.mxu0 %v23
  %v102 = vpop.f32.mrf.mxu0
  %v103 = vadd.f32 0.0, %v102
  %104 = vmatmul.f32.gmra.mxu0 %v24
  %v105 = vpop.f32.mrf.mxu0
  %v106 = vadd.f32 0.0, %v105
  %107 = vmatmul.f32.gmra.mxu0 %v25
  %v108 = vpop.f32.mrf.mxu0
  %v109 = vadd.f32 0.0, %v108
  %110 = vmatmul.f32.gmra.mxu0 %v26
  %v111 = vpop.f32.mrf.mxu0
  %v112 = vadd.f32 0.0, %v111
  %113 = vmatmul.f32.gmra.mxu0 %v27
  %v114 = vpop.f32.mrf.mxu0
  %v115 = vadd.f32 0.0, %v114
  %116 = vmatmul.f32.gmra.mxu0 %v28
  %v117 = vpop.f32.mrf.mxu0
  %v118 = vadd.f32 0.0, %v117
  %119 = vmatmul.f32.gmra.mxu0 %v29
  %v120 = vpop.f32.mrf.mxu0
  %v121 = vadd.f32 0.0, %v120
  %122 = vmatmul.f32.gmra.mxu0 %v30
  %v123 = vpop.f32.mrf.mxu0
  %v124 = vadd.f32 0.0, %v123
  %125 = vmatmul.f32.gmra.mxu0 %v31
  %v126 = vpop.f32.mrf.mxu0
  %v127 = vadd.f32 0.0, %v126
  %128 = vdwg.mxu0
  %129 = vmatpush.msra.mxu0 %v63
  %130 = vmatpush.msra.mxu0 %v61
  %131 = vmatpush.msra.mxu0 %v59
  %132 = vmatpush.msra.mxu0 %v57
  %133 = vmatpush.msra.mxu0 %v55
  %134 = vmatpush.msra.mxu0 %v53
  %135 = vmatpush.msra.mxu0 %v51
  %136 = vmatpush.msra.mxu0 %v49
  %137 = vmatpush.msra.mxu0 %v47
  %138 = vmatpush.msra.mxu0 %v45
  %139 = vmatpush.msra.mxu0 %v43
  %140 = vmatpush.msra.mxu0 %v41
  %141 = vmatpush.msra.mxu0 %v39
  %142 = vmatpush.msra.mxu0 %v37
  %143 = vmatpush.msra.mxu0 %v35
  %144 = vmatpush.msra.mxu0 %v33
  %145 = vmatmul.f32.gmra.mxu0 %v16
  %v146 = vpop.f32.mrf.mxu0
  %v147 = vadd.f32 0.0, %v146
  %148 = vmatmul.f32.gmra.mxu0 %v17
  %v149 = vpop.f32.mrf.mxu0
  %v150 = vadd.f32 0.0, %v149
  %151 = vmatmul.f32.gmra.mxu0 %v18
  %v152 = vpop.f32.mrf.mxu0
  %v153 = vadd.f32 0.0, %v152
  %154 = vmatmul.f32.gmra.mxu0 %v19
  %v155 = vpop.f32.mrf.mxu0
  %v156 = vadd.f32 0.0, %v155
  %157 = vmatmul.f32.gmra.mxu0 %v20
  %v158 = vpop.f32.mrf.mxu0
  %v159 = vadd.f32 0.0, %v158
  %160 = vmatmul.f32.gmra.mxu0 %v21
  %v161 = vpop.f32.mrf.mxu0
  %v162 = vadd.f32 0.0, %v161
  %163 = vmatmul.f32.gmra.mxu0 %v22
  %v164 = vpop.f32.mrf.mxu0
  %v165 = vadd.f32 0.0, %v164
  %166 = vmatmul.f32.gmra.mxu0 %v23
  %v167 = vpop.f32.mrf.mxu0
  %v168 = vadd.f32 0.0, %v167
  %169 = vmatmul.f32.gmra.mxu0 %v24
  %v170 = vpop.f32.mrf.mxu0
  %v171 = vadd.f32 0.0, %v170
  %172 = vmatmul.f32.gmra.mxu0 %v25
  %v173 = vpop.f32.mrf.mxu0
  %v174 = vadd.f32 0.0, %v173
  %175 = vmatmul.f32.gmra.mxu0 %v26
  %v176 = vpop.f32.mrf.mxu0
  %v177 = vadd.f32 0.0, %v176
  %178 = vmatmul.f32.gmra.mxu0 %v27
  %v179 = vpop.f32.mrf.mxu0
  %v180 = vadd.f32 0.0, %v179
  %181 = vmatmul.f32.gmra.mxu0 %v28
  %v182 = vpop.f32.mrf.mxu0
  %v183 = vadd.f32 0.0, %v182
  %184 = vmatmul.f32.gmra.mxu0 %v29
  %v185 = vpop.f32.mrf.mxu0
  %v186 = vadd.f32 0.0, %v185
  %187 = vmatmul.f32.gmra.mxu0 %v30
  %v188 = vpop.f32.mrf.mxu0
  %v189 = vadd.f32 0.0, %v188
  %190 = vmatmul.f32.gmra.mxu0 %v31
  %v191 = vpop.f32.mrf.mxu0
  %v192 = vadd.f32 0.0, %v191
  %193 = vdwg.mxu0
  %v194 = vpack.c.bf16 %v82, %v82
  %v195 = vpack.c.bf16 %v85, %v85
  %v196 = vpack.c.bf16 %v88, %v88
  %v197 = vpack.c.bf16 %v91, %v91
  %v198 = vpack.c.bf16 %v94, %v94
  %v199 = vpack.c.bf16 %v97, %v97
  %v200 = vpack.c.bf16 %v100, %v100
  %v201 = vpack.c.bf16 %v103, %v103
  %v202 = vpack.c.bf16 %v106, %v106
  %v203 = vpack.c.bf16 %v109, %v109
  %v204 = vpack.c.bf16 %v112, %v112
  %v205 = vpack.c.bf16 %v115, %v115
  %v206 = vpack.c.bf16 %v118, %v118
  %v207 = vpack.c.bf16 %v121, %v121
  %v208 = vpack.c.bf16 %v124, %v124
  %v209 = vpack.c.bf16 %v127, %v127
  %210 = vst [vmem:[%s3] sm:$0xf] %v194
  %211 = vst [vmem:[%s3 + $0x4] sm:$0xf] %v195
  %212 = vst [vmem:[%s3 + $0x8] sm:$0xf] %v196
  %213 = vst [vmem:[%s3 + $0xc] sm:$0xf] %v197
  %214 = vst [vmem:[%s3 + $0x10] sm:$0xf] %v198
  %215 = vst [vmem:[%s3 + $0x14] sm:$0xf] %v199
  %216 = vst [vmem:[%s3 + $0x18] sm:$0xf] %v200
  %217 = vst [vmem:[%s3 + $0x1c] sm:$0xf] %v201
  %218 = vst [vmem:[%s3 + $0x20] sm:$0xf] %v202
  %219 = vst [vmem:[%s3 + $0x24] sm:$0xf] %v203
  %220 = vst [vmem:[%s3 + $0x28] sm:$0xf] %v204
  %221 = vst [vmem:[%s3 + $0x2c] sm:$0xf] %v205
  %222 = vst [vmem:[%s3 + $0x30] sm:$0xf] %v206
  %223 = vst [vmem:[%s3 + $0x34] sm:$0xf] %v207
  %224 = vst [vmem:[%s3 + $0x38] sm:$0xf] %v208
  %225 = vst [vmem:[%s3 + $0x3c] sm:$0xf] %v209
  %v226 = vld [vmem:[%s2] sm:$0x1]
  %v228 = vperm.slane %v226, 0
  %v230 = vadd.f32 %v147, %v228
  %v231 = vadd.f32 %v150, %v228
  %v232 = vadd.f32 %v153, %v228
  %v233 = vadd.f32 %v156, %v228
  %v234 = vadd.f32 %v159, %v228
  %v235 = vadd.f32 %v162, %v228
  %v236 = vadd.f32 %v165, %v228
  %v237 = vadd.f32 %v168, %v228
  %v238 = vadd.f32 %v171, %v228
  %v239 = vadd.f32 %v174, %v228
  %v240 = vadd.f32 %v177, %v228
  %v241 = vadd.f32 %v180, %v228
  %v242 = vadd.f32 %v183, %v228
  %v243 = vadd.f32 %v186, %v228
  %v244 = vadd.f32 %v189, %v228
  %v245 = vadd.f32 %v192, %v228
  %246 = vst [vmem:[%s4] sm:$0xff] %v230
  %247 = vst [vmem:[%s4 + $0x8] sm:$0xff] %v231
  %248 = vst [vmem:[%s4 + $0x10] sm:$0xff] %v232
  %249 = vst [vmem:[%s4 + $0x18] sm:$0xff] %v233
  %250 = vst [vmem:[%s4 + $0x20] sm:$0xff] %v234
  %251 = vst [vmem:[%s4 + $0x28] sm:$0xff] %v235
  %252 = vst [vmem:[%s4 + $0x30] sm:$0xff] %v236
  %253 = vst [vmem:[%s4 + $0x38] sm:$0xff] %v237
  %254 = vst [vmem:[%s4 + $0x40] sm:$0xff] %v238
  %255 = vst [vmem:[%s4 + $0x48] sm:$0xff] %v239
  %256 = vst [vmem:[%s4 + $0x50] sm:$0xff] %v240
  %257 = vst [vmem:[%s4 + $0x58] sm:$0xff] %v241
  %258 = vst [vmem:[%s4 + $0x60] sm:$0xff] %v242
  %259 = vst [vmem:[%s4 + $0x68] sm:$0xff] %v243
  %260 = vst [vmem:[%s4 + $0x70] sm:$0xff] %v244
  %261 = vst [vmem:[%s4 + $0x78] sm:$0xff] %v245
  // Predicated region
  $region14: #{gnn_encoder_apply.4} parent=0 // pred_check
    _
  $region15: #{gnn_encoder_apply.4} parent=0 // pred_check_branch
    %263 = sbr.rel (0) target = $region17
  $region16: #{gnn_encoder_apply.4} parent=0 // pred_region
    _
  $region17: #{gnn_encoder_apply.4} parent=0 // pred_fallthru
    _
  // Predicated region
  $region18: #{gnn_encoder_apply.4} parent=0 // pred_check
    _
  $region19: #{gnn_encoder_apply.4} parent=0 // pred_check_branch
    %265 = sbr.rel (0) target = $region21
  $region20: #{gnn_encoder_apply.4} parent=0 // pred_region
    _
  $region21: #{gnn_encoder_apply.4} parent=0 // pred_fallthru
    _
  // Predicated region
  $region22: #{gnn_encoder_apply.4} parent=0 // pred_check
    _
  $region23: #{gnn_encoder_apply.4} parent=0 // pred_check_branch
    %267 = sbr.rel (0) target = $region25
  $region24: #{gnn_encoder_apply.4} parent=0 // pred_region
    _
  $region25: #{gnn_encoder_apply.4} parent=0 // pred_fallthru
    _
  // Predicated region
  $region26: #{gnn_encoder_apply.4} parent=0 // pred_check
    _
  $region27: #{gnn_encoder_apply.4} parent=0 // pred_check_branch
    %269 = sbr.rel (0) target = $region29
  $region28: #{gnn_encoder_apply.4} parent=0 // pred_region
    _
  $region29: #{gnn_encoder_apply.4} parent=0 // pred_fallthru
    _

// kernel: gnn_encoder_apply.5
$region0: #{gnn_encoder_apply.5}
  #allocation0 [shape = 'u32[]', space=smem, size = 0x4, offset = 0x4, fixed_abs, tag = 'smem constant byte address 0x4 - core index']
  #allocation1 [shape = 'u32[72,128]{1,0:T(1,128)}', space=vmem, size = 0x9000, scoped, tag = 'internal scratch']
  #allocation2 [shape = 'f32[128,128]{1,0:T(8,128)}', space=vmem, size = 0x10000, scoped, tag = 'scratch operand']
  #allocation3 [shape = 's32[1]{0}', space=sflag, size = 0x4, scoped, tag = 'scoped memory for gnn_encoder_apply.5']
  #allocation4 [shape = 's32[1]{0:T(128)S(6)}', space=smem, size = 0x200, scoped, tag = 'prefetched SMEM operand 0']
  #allocation5 [shape = 's32[1]{0:T(128)S(6)}', space=smem, size = 0x200, scoped, tag = 'prefetched SMEM operand 1']
  %s0 = inlined_call_operand.<no memory space> [shape: s32[1], index: 0, kind: input, shape index: {}]
  %s1 = inlined_call_operand.<no memory space> [shape: s32[1], index: 1, kind: input, shape index: {}]
  %s2 = inlined_call_operand.vmem [shape: s8[128,128], index: 2, kind: input, shape index: {}]
  %s3 = inlined_call_operand.vmem [shape: bf16[128,128], index: 3, kind: input, shape index: {}]
  %s4 = inlined_call_operand.vmem [shape: f32[128,128], index: 4, kind: input, shape index: {}]
  %s5 = inlined_call_operand.vmem [shape: f32[1,128], index: 5, kind: input, shape index: {}]
  %s6 = inlined_call_operand.vmem [shape: f32[1,128], index: 6, kind: input, shape index: {}]
  %s7 = inlined_call_operand.vmem [shape: bf16[128,128], index: 7, kind: output, shape index: {}]
  %s8 = sld [smem:[#allocation0]]
  $region42: #{gnn_encoder_apply.5} parent=0
    _
  %s10 = ssub.s32 1, %s8
  %s11 = scalar_select 0, %s10, %s8
  %12 = sst [smem:[#allocation4]] %s0
  %13 = sst [smem:[#allocation5]] %s1
  // Predicated region
  $region2: #{gnn_encoder_apply.5} parent=0 // pred_check
    _
  $region3: #{gnn_encoder_apply.5} parent=0 // pred_check_branch
    %15 = sbr.rel (0) target = $region5
  $region4: #{gnn_encoder_apply.5} parent=0 // pred_region
    %s16 = sadd.s32 0, 0
    %s17 = sld [smem:[#allocation4 + %s16]]
    %p18 = scmp.lt.s32.totalorder %s17, 0
    %s19 = scalar_select %p18, %s17, 0
    %s20 = smul.addr %s19, 8
    %s21 = scalar_lea.vmem %s2, %s20
    %s22 = sadd.s32 0, 0
    %s23 = sld [smem:[#allocation4 + %s22]]
  $region5: #{gnn_encoder_apply.5} parent=0 // pred_fallthru
    _
  // Predicated region
  $region6: #{gnn_encoder_apply.5} parent=0 // pred_check
    _
  $region7: #{gnn_encoder_apply.5} parent=0 // pred_check_branch
    %25 = sbr.rel (0) target = $region9
  $region8: #{gnn_encoder_apply.5} parent=0 // pred_region
    %s26 = sadd.s32 0, 0
    %s27 = sld [smem:[#allocation4 + %s26]]
    %s28 = smul.u32 16, %s27
    %p29 = scmp.lt.s32.totalorder %s28, 15
    %s30 = scalar_select %p29, %s28, 15
    %s31 = smul.addr %s30, 4
    %s32 = scalar_lea.vmem %s3, %s31
    %s33 = sadd.s32 0, 0
    %s34 = sld [smem:[#allocation4 + %s33]]
    %s35 = smul.u32 16, %s34
  $region9: #{gnn_encoder_apply.5} parent=0 // pred_fallthru
    _
  // Predicated region
  $region10: #{gnn_encoder_apply.5} parent=0 // pred_check
    _
  $region11: #{gnn_encoder_apply.5} parent=0 // pred_check_branch
    %37 = sbr.rel (0) target = $region13
  $region12: #{gnn_encoder_apply.5} parent=0 // pred_region
    _
  $region13: #{gnn_encoder_apply.5} parent=0 // pred_fallthru
    _
  // Predicated region
  $region14: #{gnn_encoder_apply.5} parent=0 // pred_check
    _
  $region15: #{gnn_encoder_apply.5} parent=0 // pred_check_branch
    %39 = sbr.rel (0) target = $region17
  $region16: #{gnn_encoder_apply.5} parent=0 // pred_region
    _
  $region17: #{gnn_encoder_apply.5} parent=0 // pred_fallthru
    _
  // Predicated region
  $region18: #{gnn_encoder_apply.5} parent=0 // pred_check
    _
  $region19: #{gnn_encoder_apply.5} parent=0 // pred_check_branch
    %41 = sbr.rel (0) target = $region21
  $region20: #{gnn_encoder_apply.5} parent=0 // pred_region
    _
  $region21: #{gnn_encoder_apply.5} parent=0 // pred_fallthru
    _
  %s42 = sadd.s32 0, 0
  %s43 = sld [smem:[#allocation4 + %s42]]
  %p44 = scmp.lt.s32.totalorder %s43, 0
  %s45 = scalar_select %p44, %s43, 0
  %s46 = smul.addr %s45, 8
  %s47 = scalar_lea.vmem %s2, %s46
  %s48 = sadd.s32 0, 0
  %s49 = sld [smem:[#allocation4 + %s48]]
  %s50 = smul.u32 16, %s49
  %p51 = scmp.lt.s32.totalorder %s50, 15
  %s52 = scalar_select %p51, %s50, 15
  %s53 = smul.addr %s52, 4
  %s54 = scalar_lea.vmem %s3, %s53
  %s55 = sadd.s32 0, 0
  %s56 = sld [smem:[#allocation4 + %s55]]
  %p57 = scmp.lt.s32.totalorder %s56, 0
  %s58 = scalar_select %p57, %s56, 0
  %s59 = smul.addr %s58, 8
  %s60 = scalar_lea.vmem %s2, %s59
  %s61 = sadd.s32 0, 0
  %s62 = sld [smem:[#allocation4 + %s61]]
  %s63 = sadd.s32 0, 0
  %s64 = sld [smem:[#allocation4 + %s63]]
  %s65 = smul.u32 16, %s64
  %p66 = scmp.lt.s32.totalorder %s65, 15
  %s67 = scalar_select %p66, %s65, 15
  %s68 = smul.addr %s67, 4
  %s69 = scalar_lea.vmem %s3, %s68
  %s70 = sadd.s32 0, 0
  %s71 = sld [smem:[#allocation4 + %s70]]
  %s72 = smul.u32 16, %s71
  %p73 = scmp.eq.s32.totalorder 0, 0
  // Predicated region
  $region22: #{gnn_encoder_apply.5} parent=0 // pred_check
    %p74 = pneg %p73
  $region23: #{gnn_encoder_apply.5} parent=0 // pred_check_branch
    %76 = sbr.rel (%p74) target = $region25
  $region24: #{gnn_encoder_apply.5} parent=0 // pred_region
    %v77 = vld [vmem:[%s4] sm:$0xff]
    %v78 = vld [vmem:[%s4 + $0x8] sm:$0xff]
    %v79 = vld [vmem:[%s4 + $0x10] sm:$0xff]
    %v80 = vld [vmem:[%s4 + $0x18] sm:$0xff]
    %v81 = vld [vmem:[%s4 + $0x20] sm:$0xff]
    %v82 = vld [vmem:[%s4 + $0x28] sm:$0xff]
    %v83 = vld [vmem:[%s4 + $0x30] sm:$0xff]
    %v84 = vld [vmem:[%s4 + $0x38] sm:$0xff]
    %v85 = vld [vmem:[%s4 + $0x40] sm:$0xff]
    %v86 = vld [vmem:[%s4 + $0x48] sm:$0xff]
    %v87 = vld [vmem:[%s4 + $0x50] sm:$0xff]
    %v88 = vld [vmem:[%s4 + $0x58] sm:$0xff]
    %v89 = vld [vmem:[%s4 + $0x60] sm:$0xff]
    %v90 = vld [vmem:[%s4 + $0x68] sm:$0xff]
    %v91 = vld [vmem:[%s4 + $0x70] sm:$0xff]
    %v92 = vld [vmem:[%s4 + $0x78] sm:$0xff]
    %93 = vst [vmem:[#allocation2] sm:$0xff] %v77
    %94 = vst [vmem:[#allocation2 + $0x8] sm:$0xff] %v78
    %95 = vst [vmem:[#allocation2 + $0x10] sm:$0xff] %v79
    %96 = vst [vmem:[#allocation2 + $0x18] sm:$0xff] %v80
    %97 = vst [vmem:[#allocation2 + $0x20] sm:$0xff] %v81
    %98 = vst [vmem:[#allocation2 + $0x28] sm:$0xff] %v82
    %99 = vst [vmem:[#allocation2 + $0x30] sm:$0xff] %v83
    %100 = vst [vmem:[#allocation2 + $0x38] sm:$0xff] %v84
    %101 = vst [vmem:[#allocation2 + $0x40] sm:$0xff] %v85
    %102 = vst [vmem:[#allocation2 + $0x48] sm:$0xff] %v86
    %103 = vst [vmem:[#allocation2 + $0x50] sm:$0xff] %v87
    %104 = vst [vmem:[#allocation2 + $0x58] sm:$0xff] %v88
    %105 = vst [vmem:[#allocation2 + $0x60] sm:$0xff] %v89
    %106 = vst [vmem:[#allocation2 + $0x68] sm:$0xff] %v90
    %107 = vst [vmem:[#allocation2 + $0x70] sm:$0xff] %v91
    %108 = vst [vmem:[#allocation2 + $0x78] sm:$0xff] %v92
  $region25: #{gnn_encoder_apply.5} parent=0 // pred_fallthru
    _
  %s109 = sld [smem:[#allocation5]]
  %p110 = scmp.lt.s32.totalorder 0, %s109
  // Predicated region
  $region26: #{gnn_encoder_apply.5} parent=0 // pred_check
    %p111 = pneg %p110
  $region27: #{gnn_encoder_apply.5} parent=0 // pred_check_branch
    %113 = sbr.rel (%p111) target = $region29
  $region28: #{gnn_encoder_apply.5} parent=0 // pred_region
    %v114 = vld [vmem:[%s60] sm:$0xff]
    %v115 = vld [vmem:[%s60 + $0x8] sm:$0xff]
    %v116 = vld [vmem:[%s60 + $0x10] sm:$0xff]
    %v117 = vld [vmem:[%s60 + $0x18] sm:$0xff]
    %v118 = vunpack.c.0.s8 %v114
    %v119 = vunpack.c.1.s8 %v114
    %v120 = vunpack.c.2.s8 %v114
    %v121 = vunpack.c.3.s8 %v114
    %v122 = vunpack.c.0.s8 %v115
    %v123 = vunpack.c.1.s8 %v115
    %v124 = vunpack.c.2.s8 %v115
    %v125 = vunpack.c.3.s8 %v115
    %v126 = vunpack.c.0.s8 %v116
    %v127 = vunpack.c.1.s8 %v116
    %v128 = vunpack.c.2.s8 %v116
    %v129 = vunpack.c.3.s8 %v116
    %v130 = vunpack.c.0.s8 %v117
    %v131 = vunpack.c.1.s8 %v117
    %v132 = vunpack.c.2.s8 %v117
    %v133 = vunpack.c.3.s8 %v117
    %v134 = vcvt.s32.f32 %v118
    %v135 = vcvt.s32.f32 %v119
    %v136 = vcvt.s32.f32 %v120
    %v137 = vcvt.s32.f32 %v121
    %v138 = vcvt.s32.f32 %v122
    %v139 = vcvt.s32.f32 %v123
    %v140 = vcvt.s32.f32 %v124
    %v141 = vcvt.s32.f32 %v125
    %v142 = vcvt.s32.f32 %v126
    %v143 = vcvt.s32.f32 %v127
    %v144 = vcvt.s32.f32 %v128
    %v145 = vcvt.s32.f32 %v129
    %v146 = vcvt.s32.f32 %v130
    %v147 = vcvt.s32.f32 %v131
    %v148 = vcvt.s32.f32 %v132
    %v149 = vcvt.s32.f32 %v133
    %v150 = vpack.c.bf16 %v135, %v134
    %v151 = vpack.c.bf16 %v137, %v136
    %v152 = vpack.c.bf16 %v139, %v138
    %v153 = vpack.c.bf16 %v141, %v140
    %v154 = vpack.c.bf16 %v143, %v142
    %v155 = vpack.c.bf16 %v145, %v144
    %v156 = vpack.c.bf16 %v147, %v146
    %v157 = vpack.c.bf16 %v149, %v148
    %v158 = vld [vmem:[#allocation2] sm:$0xff]
    %v159 = vld [vmem:[#allocation2 + $0x8] sm:$0xff]
    %v160 = vld [vmem:[#allocation2 + $0x10] sm:$0xff]
    %v161 = vld [vmem:[#allocation2 + $0x18] sm:$0xff]
    %v162 = vld [vmem:[#allocation2 + $0x20] sm:$0xff]
    %v163 = vld [vmem:[#allocation2 + $0x28] sm:$0xff]
    %v164 = vld [vmem:[#allocation2 + $0x30] sm:$0xff]
    %v165 = vld [vmem:[#allocation2 + $0x38] sm:$0xff]
    %v166 = vld [vmem:[#allocation2 + $0x40] sm:$0xff]
    %v167 = vld [vmem:[#allocation2 + $0x48] sm:$0xff]
    %v168 = vld [vmem:[#allocation2 + $0x50] sm:$0xff]
    %v169 = vld [vmem:[#allocation2 + $0x58] sm:$0xff]
    %v170 = vld [vmem:[#allocation2 + $0x60] sm:$0xff]
    %v171 = vld [vmem:[#allocation2 + $0x68] sm:$0xff]
    %v172 = vld [vmem:[#allocation2 + $0x70] sm:$0xff]
    %v173 = vld [vmem:[#allocation2 + $0x78] sm:$0xff]
    %v174 = vld [vmem:[%s69] sm:$0xf]
    %v175 = vld [vmem:[%s69 + $0x4] sm:$0xf]
    %v176 = vld [vmem:[%s69 + $0x8] sm:$0xf]
    %v177 = vld [vmem:[%s69 + $0xc] sm:$0xf]
    %v178 = vld [vmem:[%s69 + $0x10] sm:$0xf]
    %v179 = vld [vmem:[%s69 + $0x14] sm:$0xf]
    %v180 = vld [vmem:[%s69 + $0x18] sm:$0xf]
    %v181 = vld [vmem:[%s69 + $0x1c] sm:$0xf]
    %v182 = vld [vmem:[%s69 + $0x20] sm:$0xf]
    %v183 = vld [vmem:[%s69 + $0x24] sm:$0xf]
    %v184 = vld [vmem:[%s69 + $0x28] sm:$0xf]
    %v185 = vld [vmem:[%s69 + $0x2c] sm:$0xf]
    %v186 = vld [vmem:[%s69 + $0x30] sm:$0xf]
    %v187 = vld [vmem:[%s69 + $0x34] sm:$0xf]
    %v188 = vld [vmem:[%s69 + $0x38] sm:$0xf]
    %v189 = vld [vmem:[%s69 + $0x3c] sm:$0xf]
    %v206 = vunpack.c.l.b16 %v174
    %v207 = vunpack.c.l.b16 %v175
    %v208 = vunpack.c.l.b16 %v176
    %v209 = vunpack.c.l.b16 %v177
    %v210 = vunpack.c.l.b16 %v178
    %v211 = vunpack.c.l.b16 %v179
    %v212 = vunpack.c.l.b16 %v180
    %v213 = vunpack.c.l.b16 %v181
    %v214 = vunpack.c.l.b16 %v182
    %v215 = vunpack.c.l.b16 %v183
    %v216 = vunpack.c.l.b16 %v184
    %v217 = vunpack.c.l.b16 %v185
    %v218 = vunpack.c.l.b16 %v186
    %v219 = vunpack.c.l.b16 %v187
    %v220 = vunpack.c.l.b16 %v188
    %v221 = vunpack.c.l.b16 %v189
    %v222 = vpack.c.b16 %v207, %v206
    %v223 = vpack.c.b16 %v209, %v208
    %v224 = vpack.c.b16 %v211, %v210
    %v225 = vpack.c.b16 %v213, %v212
    %v226 = vpack.c.b16 %v215, %v214
    %v227 = vpack.c.b16 %v217, %v216
    %v228 = vpack.c.b16 %v219, %v218
    %v229 = vpack.c.b16 %v221, %v220
    %238 = vmatpush.bf16.msra.mxu0 %v229
    %239 = vmatpush.bf16.msra.mxu0 %v228
    %240 = vmatpush.bf16.msra.mxu0 %v227
    %241 = vmatpush.bf16.msra.mxu0 %v226
    %242 = vmatpush.bf16.msra.mxu0 %v225
    %243 = vmatpush.bf16.msra.mxu0 %v224
    %244 = vmatpush.bf16.msra.mxu0 %v223
    %245 = vmatpush.bf16.msra.mxu0 %v222
    %246 = vmatmul.bf16.gmra.mxu0 %v150
    %v247 = vpop.f32.mrf.mxu0
    %v248 = vadd.f32 0.0, %v247
    %v249 = vpop.f32.mrf.mxu0
    %v250 = vadd.f32 0.0, %v249
    %251 = vmatmul.bf16.gmra.mxu0 %v151
    %v252 = vpop.f32.mrf.mxu0
    %v253 = vadd.f32 0.0, %v252
    %v254 = vpop.f32.mrf.mxu0
    %v255 = vadd.f32 0.0, %v254
    %256 = vmatmul.bf16.gmra.mxu0 %v152
    %v257 = vpop.f32.mrf.mxu0
    %v258 = vadd.f32 0.0, %v257
    %v259 = vpop.f32.mrf.mxu0
    %v260 = vadd.f32 0.0, %v259
    %261 = vmatmul.bf16.gmra.mxu0 %v153
    %v262 = vpop.f32.mrf.mxu0
    %v263 = vadd.f32 0.0, %v262
    %v264 = vpop.f32.mrf.mxu0
    %v265 = vadd.f32 0.0, %v264
    %266 = vmatmul.bf16.gmra.mxu0 %v154
    %v267 = vpop.f32.mrf.mxu0
    %v268 = vadd.f32 0.0, %v267
    %v269 = vpop.f32.mrf.mxu0
    %v270 = vadd.f32 0.0, %v269
    %271 = vmatmul.bf16.gmra.mxu0 %v155
    %v272 = vpop.f32.mrf.mxu0
    %v273 = vadd.f32 0.0, %v272
    %v274 = vpop.f32.mrf.mxu0
    %v275 = vadd.f32 0.0, %v274
    %276 = vmatmul.bf16.gmra.mxu0 %v156
    %v277 = vpop.f32.mrf.mxu0
    %v278 = vadd.f32 0.0, %v277
    %v279 = vpop.f32.mrf.mxu0
    %v280 = vadd.f32 0.0, %v279
    %281 = vmatmul.bf16.gmra.mxu0 %v157
    %v282 = vpop.f32.mrf.mxu0
    %v283 = vadd.f32 0.0, %v282
    %v284 = vpop.f32.mrf.mxu0
    %v285 = vadd.f32 0.0, %v284
    %286 = vdwg.mxu0
    %v287 = vadd.f32 %v158, %v248
    %v288 = vadd.f32 %v159, %v250
    %v289 = vadd.f32 %v160, %v253
    %v290 = vadd.f32 %v161, %v255
    %v291 = vadd.f32 %v162, %v258
    %v292 = vadd.f32 %v163, %v260
    %v293 = vadd.f32 %v164, %v263
    %v294 = vadd.f32 %v165, %v265
    %v295 = vadd.f32 %v166, %v268
    %v296 = vadd.f32 %v167, %v270
    %v297 = vadd.f32 %v168, %v273
    %v298 = vadd.f32 %v169, %v275
    %v299 = vadd.f32 %v170, %v278
    %v300 = vadd.f32 %v171, %v280
    %v301 = vadd.f32 %v172, %v283
    %v302 = vadd.f32 %v173, %v285
    %303 = vst [vmem:[#allocation2] sm:$0xff] %v287
    %304 = vst [vmem:[#allocation2 + $0x8] sm:$0xff] %v288
    %305 = vst [vmem:[#allocation2 + $0x10] sm:$0xff] %v289
    %306 = vst [vmem:[#allocation2 + $0x18] sm:$0xff] %v290
    %307 = vst [vmem:[#allocation2 + $0x20] sm:$0xff] %v291
    %308 = vst [vmem:[#allocation2 + $0x28] sm:$0xff] %v292
    %309 = vst [vmem:[#allocation2 + $0x30] sm:$0xff] %v293
    %310 = vst [vmem:[#allocation2 + $0x38] sm:$0xff] %v294
    %311 = vst [vmem:[#allocation2 + $0x40] sm:$0xff] %v295
    %312 = vst [vmem:[#allocation2 + $0x48] sm:$0xff] %v296
    %313 = vst [vmem:[#allocation2 + $0x50] sm:$0xff] %v297
    %314 = vst [vmem:[#allocation2 + $0x58] sm:$0xff] %v298
    %315 = vst [vmem:[#allocation2 + $0x60] sm:$0xff] %v299
    %316 = vst [vmem:[#allocation2 + $0x68] sm:$0xff] %v300
    %317 = vst [vmem:[#allocation2 + $0x70] sm:$0xff] %v301
    %318 = vst [vmem:[#allocation2 + $0x78] sm:$0xff] %v302
  $region29: #{gnn_encoder_apply.5} parent=0 // pred_fallthru
    _
  // Predicated region
  $region30: #{gnn_encoder_apply.5} parent=0 // pred_check
    %p319 = pneg %p73
  $region31: #{gnn_encoder_apply.5} parent=0 // pred_check_branch
    %321 = sbr.rel (%p319) target = $region33
  $region32: #{gnn_encoder_apply.5} parent=0 // pred_region
    %v322 = vld [vmem:[#allocation2] sm:$0xff]
    %v323 = vld [vmem:[#allocation2 + $0x8] sm:$0xff]
    %v324 = vld [vmem:[#allocation2 + $0x10] sm:$0xff]
    %v325 = vld [vmem:[#allocation2 + $0x18] sm:$0xff]
    %v326 = vld [vmem:[#allocation2 + $0x20] sm:$0xff]
    %v327 = vld [vmem:[#allocation2 + $0x28] sm:$0xff]
    %v328 = vld [vmem:[#allocation2 + $0x30] sm:$0xff]
    %v329 = vld [vmem:[#allocation2 + $0x38] sm:$0xff]
    %v330 = vld [vmem:[#allocation2 + $0x40] sm:$0xff]
    %v331 = vld [vmem:[#allocation2 + $0x48] sm:$0xff]
    %v332 = vld [vmem:[#allocation2 + $0x50] sm:$0xff]
    %v333 = vld [vmem:[#allocation2 + $0x58] sm:$0xff]
    %v334 = vld [vmem:[#allocation2 + $0x60] sm:$0xff]
    %v335 = vld [vmem:[#allocation2 + $0x68] sm:$0xff]
    %v336 = vld [vmem:[#allocation2 + $0x70] sm:$0xff]
    %v337 = vld [vmem:[#allocation2 + $0x78] sm:$0xff]
    %v338 = vmul.f32 %v322, %v322
    %v339 = vmul.f32 %v323, %v323
    %v340 = vmul.f32 %v324, %v324
    %v341 = vmul.f32 %v325, %v325
    %v342 = vmul.f32 %v326, %v326
    %v343 = vmul.f32 %v327, %v327
    %v344 = vmul.f32 %v328, %v328
    %v345 = vmul.f32 %v329, %v329
    %v346 = vmul.f32 %v330, %v330
    %v347 = vmul.f32 %v331, %v331
    %v348 = vmul.f32 %v332, %v332
    %v349 = vmul.f32 %v333, %v333
    %v350 = vmul.f32 %v334, %v334
    %v351 = vmul.f32 %v335, %v335
    %v352 = vmul.f32 %v336, %v336
    %v353 = vmul.f32 %v337, %v337
    %354 = vadd.xlane.f32.xlu0 %v338
    %v355 = vpop.xlane.xlu0 %354
    %356 = vadd.xlane.f32.xlu0 %v339
    %v357 = vpop.xlane.xlu0 %356
    %358 = vadd.xlane.f32.xlu0 %v340
    %v359 = vpop.xlane.xlu0 %358
    %360 = vadd.xlane.f32.xlu0 %v341
    %v361 = vpop.xlane.xlu0 %360
    %362 = vadd.xlane.f32.xlu0 %v342
    %v363 = vpop.xlane.xlu0 %362
    %364 = vadd.xlane.f32.xlu0 %v343
    %v365 = vpop.xlane.xlu0 %364
    %366 = vadd.xlane.f32.xlu0 %v344
    %v367 = vpop.xlane.xlu0 %366
    %368 = vadd.xlane.f32.xlu0 %v345
    %v369 = vpop.xlane.xlu0 %368
    %370 = vadd.xlane.f32.xlu0 %v346
    %v371 = vpop.xlane.xlu0 %370
    %372 = vadd.xlane.f32.xlu0 %v347
    %v373 = vpop.xlane.xlu0 %372
    %374 = vadd.xlane.f32.xlu0 %v348
    %v375 = vpop.xlane.xlu0 %374
    %376 = vadd.xlane.f32.xlu0 %v349
    %v377 = vpop.xlane.xlu0 %376
    %378 = vadd.xlane.f32.xlu0 %v350
    %v379 = vpop.xlane.xlu0 %378
    %380 = vadd.xlane.f32.xlu0 %v351
    %v381 = vpop.xlane.xlu0 %380
    %382 = vadd.xlane.f32.xlu0 %v352
    %v383 = vpop.xlane.xlu0 %382
    %384 = vadd.xlane.f32.xlu0 %v353
    %v385 = vpop.xlane.xlu0 %384
    %v386 = vmax.f32 %v355, 1e-24
    %v387 = vmax.f32 %v357, 1e-24
    %v388 = vmax.f32 %v359, 1e-24
    %v389 = vmax.f32 %v361, 1e-24
    %v390 = vmax.f32 %v363, 1e-24
    %v391 = vmax.f32 %v365, 1e-24
    %v392 = vmax.f32 %v367, 1e-24
    %v393 = vmax.f32 %v369, 1e-24
    %v394 = vmax.f32 %v371, 1e-24
    %v395 = vmax.f32 %v373, 1e-24
    %v396 = vmax.f32 %v375, 1e-24
    %v397 = vmax.f32 %v377, 1e-24
    %v398 = vmax.f32 %v379, 1e-24
    %v399 = vmax.f32 %v381, 1e-24
    %v400 = vmax.f32 %v383, 1e-24
    %v401 = vmax.f32 %v385, 1e-24
    %v402 = vrsqrt.pop %v386
    %v403 = vmul.f32 %v402, %v386
    %v404 = vmul.f32 %v403, %v402
    %v405 = vmul.f32 0.5, %v404
    %v406 = vsub.f32 1.5, %v405
    %v407 = vmul.f32 %v402, %v406
    %vm408 = vweird.f32 %v386
    %vm409 = vweird.f32 %v402
    %vm410 = vmor %vm408, %vm409
    %v411 = vsel %vm410, %v402, %v407
    %v412 = vrsqrt.pop %v387
    %v413 = vmul.f32 %v412, %v387
    %v414 = vmul.f32 %v413, %v412
    %v415 = vmul.f32 0.5, %v414
    %v416 = vsub.f32 1.5, %v415
    %v417 = vmul.f32 %v412, %v416
    %vm418 = vweird.f32 %v387
    %vm419 = vweird.f32 %v412
    %vm420 = vmor %vm418, %vm419
    %v421 = vsel %vm420, %v412, %v417
    %v422 = vrsqrt.pop %v388
    %v423 = vmul.f32 %v422, %v388
    %v424 = vmul.f32 %v423, %v422
    %v425 = vmul.f32 0.5, %v424
    %v426 = vsub.f32 1.5, %v425
    %v427 = vmul.f32 %v422, %v426
    %vm428 = vweird.f32 %v388
    %vm429 = vweird.f32 %v422
    %vm430 = vmor %vm428, %vm429
    %v431 = vsel %vm430, %v422, %v427
    %v432 = vrsqrt.pop %v389
    %v433 = vmul.f32 %v432, %v389
    %v434 = vmul.f32 %v433, %v432
    %v435 = vmul.f32 0.5, %v434
    %v436 = vsub.f32 1.5, %v435
    %v437 = vmul.f32 %v432, %v436
    %vm438 = vweird.f32 %v389
    %vm439 = vweird.f32 %v432
    %vm440 = vmor %vm438, %vm439
    %v441 = vsel %vm440, %v432, %v437
    %v442 = vrsqrt.pop %v390
    %v443 = vmul.f32 %v442, %v390
    %v444 = vmul.f32 %v443, %v442
    %v445 = vmul.f32 0.5, %v444
    %v446 = vsub.f32 1.5, %v445
    %v447 = vmul.f32 %v442, %v446
    %vm448 = vweird.f32 %v390
    %vm449 = vweird.f32 %v442
    %vm450 = vmor %vm448, %vm449
    %v451 = vsel %vm450, %v442, %v447
    %v452 = vrsqrt.pop %v391
    %v453 = vmul.f32 %v452, %v391
    %v454 = vmul.f32 %v453, %v452
    %v455 = vmul.f32 0.5, %v454
    %v456 = vsub.f32 1.5, %v455
    %v457 = vmul.f32 %v452, %v456
    %vm458 = vweird.f32 %v391
    %vm459 = vweird.f32 %v452
    %vm460 = vmor %vm458, %vm459
    %v461 = vsel %vm460, %v452, %v457
    %v462 = vrsqrt.pop %v392
    %v463 = vmul.f32 %v462, %v392
    %v464 = vmul.f32 %v463, %v462
    %v465 = vmul.f32 0.5, %v464
    %v466 = vsub.f32 1.5, %v465
    %v467 = vmul.f32 %v462, %v466
    %vm468 = vweird.f32 %v392
    %vm469 = vweird.f32 %v462
    %vm470 = vmor %vm468, %vm469
    %v471 = vsel %vm470, %v462, %v467
    %v472 = vrsqrt.pop %v393
    %v473 = vmul.f32 %v472, %v393
    %v474 = vmul.f32 %v473, %v472
    %v475 = vmul.f32 0.5, %v474
    %v476 = vsub.f32 1.5, %v475
    %v477 = vmul.f32 %v472, %v476
    %vm478 = vweird.f32 %v393
    %vm479 = vweird.f32 %v472
    %vm480 = vmor %vm478, %vm479
    %v481 = vsel %vm480, %v472, %v477
    %v482 = vrsqrt.pop %v394
    %v483 = vmul.f32 %v482, %v394
    %v484 = vmul.f32 %v483, %v482
    %v485 = vmul.f32 0.5, %v484
    %v486 = vsub.f32 1.5, %v485
    %v487 = vmul.f32 %v482, %v486
    %vm488 = vweird.f32 %v394
    %vm489 = vweird.f32 %v482
    %vm490 = vmor %vm488, %vm489
    %v491 = vsel %vm490, %v482, %v487
    %v492 = vrsqrt.pop %v395
    %v493 = vmul.f32 %v492, %v395
    %v494 = vmul.f32 %v493, %v492
    %v495 = vmul.f32 0.5, %v494
    %v496 = vsub.f32 1.5, %v495
    %v497 = vmul.f32 %v492, %v496
    %vm498 = vweird.f32 %v395
    %vm499 = vweird.f32 %v492
    %vm500 = vmor %vm498, %vm499
    %v501 = vsel %vm500, %v492, %v497
    %v502 = vrsqrt.pop %v396
    %v503 = vmul.f32 %v502, %v396
    %v504 = vmul.f32 %v503, %v502
    %v505 = vmul.f32 0.5, %v504
    %v506 = vsub.f32 1.5, %v505
    %v507 = vmul.f32 %v502, %v506
    %vm508 = vweird.f32 %v396
    %vm509 = vweird.f32 %v502
    %vm510 = vmor %vm508, %vm509
    %v511 = vsel %vm510, %v502, %v507
    %v512 = vrsqrt.pop %v397
    %v513 = vmul.f32 %v512, %v397
    %v514 = vmul.f32 %v513, %v512
    %v515 = vmul.f32 0.5, %v514
    %v516 = vsub.f32 1.5, %v515
    %v517 = vmul.f32 %v512, %v516
    %vm518 = vweird.f32 %v397
    %vm519 = vweird.f32 %v512
    %vm520 = vmor %vm518, %vm519
    %v521 = vsel %vm520, %v512, %v517
    %v522 = vrsqrt.pop %v398
    %v523 = vmul.f32 %v522, %v398
    %v524 = vmul.f32 %v523, %v522
    %v525 = vmul.f32 0.5, %v524
    %v526 = vsub.f32 1.5, %v525
    %v527 = vmul.f32 %v522, %v526
    %vm528 = vweird.f32 %v398
    %vm529 = vweird.f32 %v522
    %vm530 = vmor %vm528, %vm529
    %v531 = vsel %vm530, %v522, %v527
    %v532 = vrsqrt.pop %v399
    %v533 = vmul.f32 %v532, %v399
    %v534 = vmul.f32 %v533, %v532
    %v535 = vmul.f32 0.5, %v534
    %v536 = vsub.f32 1.5, %v535
    %v537 = vmul.f32 %v532, %v536
    %vm538 = vweird.f32 %v399
    %vm539 = vweird.f32 %v532
    %vm540 = vmor %vm538, %vm539
    %v541 = vsel %vm540, %v532, %v537
    %v542 = vrsqrt.pop %v400
    %v543 = vmul.f32 %v542, %v400
    %v544 = vmul.f32 %v543, %v542
    %v545 = vmul.f32 0.5, %v544
    %v546 = vsub.f32 1.5, %v545
    %v547 = vmul.f32 %v542, %v546
    %vm548 = vweird.f32 %v400
    %vm549 = vweird.f32 %v542
    %vm550 = vmor %vm548, %vm549
    %v551 = vsel %vm550, %v542, %v547
    %v552 = vrsqrt.pop %v401
    %v553 = vmul.f32 %v552, %v401
    %v554 = vmul.f32 %v553, %v552
    %v555 = vmul.f32 0.5, %v554
    %v556 = vsub.f32 1.5, %v555
    %v557 = vmul.f32 %v552, %v556
    %vm558 = vweird.f32 %v401
    %vm559 = vweird.f32 %v552
    %vm560 = vmor %vm558, %vm559
    %v561 = vsel %vm560, %v552, %v557
    %v562 = vmul.f32 %v322, %v411
    %v563 = vmul.f32 %v323, %v421
    %v564 = vmul.f32 %v324, %v431
    %v565 = vmul.f32 %v325, %v441
    %v566 = vmul.f32 %v326, %v451
    %v567 = vmul.f32 %v327, %v461
    %v568 = vmul.f32 %v328, %v471
    %v569 = vmul.f32 %v329, %v481
    %v570 = vmul.f32 %v330, %v491
    %v571 = vmul.f32 %v331, %v501
    %v572 = vmul.f32 %v332, %v511
    %v573 = vmul.f32 %v333, %v521
    %v574 = vmul.f32 %v334, %v531
    %v575 = vmul.f32 %v335, %v541
    %v576 = vmul.f32 %v336, %v551
    %v577 = vmul.f32 %v337, %v561
    %v578 = vld [vmem:[%s5] sm:$0x1]
    %v580 = vperm.slane %v578, 0
    %v582 = vmul.f32 %v562, %v580
    %v583 = vmul.f32 %v563, %v580
    %v584 = vmul.f32 %v564, %v580
    %v585 = vmul.f32 %v565, %v580
    %v586 = vmul.f32 %v566, %v580
    %v587 = vmul.f32 %v567, %v580
    %v588 = vmul.f32 %v568, %v580
    %v589 = vmul.f32 %v569, %v580
    %v590 = vmul.f32 %v570, %v580
    %v591 = vmul.f32 %v571, %v580
    %v592 = vmul.f32 %v572, %v580
    %v593 = vmul.f32 %v573, %v580
    %v594 = vmul.f32 %v574, %v580
    %v595 = vmul.f32 %v575, %v580
    %v596 = vmul.f32 %v576, %v580
    %v597 = vmul.f32 %v577, %v580
    %v598 = vld [vmem:[%s6] sm:$0x1]
    %v600 = vperm.slane %v598, 0
    %v602 = vadd.f32 %v582, %v600
    %v603 = vadd.f32 %v583, %v600
    %v604 = vadd.f32 %v584, %v600
    %v605 = vadd.f32 %v585, %v600
    %v606 = vadd.f32 %v586, %v600
    %v607 = vadd.f32 %v587, %v600
    %v608 = vadd.f32 %v588, %v600
    %v609 = vadd.f32 %v589, %v600
    %v610 = vadd.f32 %v590, %v600
    %v611 = vadd.f32 %v591, %v600
    %v612 = vadd.f32 %v592, %v600
    %v613 = vadd.f32 %v593, %v600
    %v614 = vadd.f32 %v594, %v600
    %v615 = vadd.f32 %v595, %v600
    %v616 = vadd.f32 %v596, %v600
    %v617 = vadd.f32 %v597, %v600
    %v618 = vmax.f32 %v602, 0.0
    %v619 = vmax.f32 %v603, 0.0
    %v620 = vmax.f32 %v604, 0.0
    %v621 = vmax.f32 %v605, 0.0
    %v622 = vmax.f32 %v606, 0.0
    %v623 = vmax.f32 %v607, 0.0
    %v624 = vmax.f32 %v608, 0.0
    %v625 = vmax.f32 %v609, 0.0
    %v626 = vmax.f32 %v610, 0.0
    %v627 = vmax.f32 %v611, 0.0
    %v628 = vmax.f32 %v612, 0.0
    %v629 = vmax.f32 %v613, 0.0
    %v630 = vmax.f32 %v614, 0.0
    %v631 = vmax.f32 %v615, 0.0
    %v632 = vmax.f32 %v616, 0.0
    %v633 = vmax.f32 %v617, 0.0
    %v634 = vpack.c.bf16 %v618, %v618
    %v635 = vpack.c.bf16 %v619, %v619
    %v636 = vpack.c.bf16 %v620, %v620
    %v637 = vpack.c.bf16 %v621, %v621
    %v638 = vpack.c.bf16 %v622, %v622
    %v639 = vpack.c.bf16 %v623, %v623
    %v640 = vpack.c.bf16 %v624, %v624
    %v641 = vpack.c.bf16 %v625, %v625
    %v642 = vpack.c.bf16 %v626, %v626
    %v643 = vpack.c.bf16 %v627, %v627
    %v644 = vpack.c.bf16 %v628, %v628
    %v645 = vpack.c.bf16 %v629, %v629
    %v646 = vpack.c.bf16 %v630, %v630
    %v647 = vpack.c.bf16 %v631, %v631
    %v648 = vpack.c.bf16 %v632, %v632
    %v649 = vpack.c.bf16 %v633, %v633
    %650 = vst [vmem:[%s7] sm:$0xf] %v634
    %651 = vst [vmem:[%s7 + $0x4] sm:$0xf] %v635
    %652 = vst [vmem:[%s7 + $0x8] sm:$0xf] %v636
    %653 = vst [vmem:[%s7 + $0xc] sm:$0xf] %v637
    %654 = vst [vmem:[%s7 + $0x10] sm:$0xf] %v638
    %655 = vst [vmem:[%s7 + $0x14] sm:$0xf] %v639
    %656 = vst [vmem:[%s7 + $0x18] sm:$0xf] %v640
    %657 = vst [vmem:[%s7 + $0x1c] sm:$0xf] %v641
    %658 = vst [vmem:[%s7 + $0x20] sm:$0xf] %v642
    %659 = vst [vmem:[%s7 + $0x24] sm:$0xf] %v643
    %660 = vst [vmem:[%s7 + $0x28] sm:$0xf] %v644
    %661 = vst [vmem:[%s7 + $0x2c] sm:$0xf] %v645
    %662 = vst [vmem:[%s7 + $0x30] sm:$0xf] %v646
    %663 = vst [vmem:[%s7 + $0x34] sm:$0xf] %v647
    %664 = vst [vmem:[%s7 + $0x38] sm:$0xf] %v648
    %665 = vst [vmem:[%s7 + $0x3c] sm:$0xf] %v649
  $region33: #{gnn_encoder_apply.5} parent=0 // pred_fallthru
    _
  // Predicated region
  $region34: #{gnn_encoder_apply.5} parent=0 // pred_check
    _
  $region35: #{gnn_encoder_apply.5} parent=0 // pred_check_branch
    %667 = sbr.rel (0) target = $region37
  $region36: #{gnn_encoder_apply.5} parent=0 // pred_region
    _
  $region37: #{gnn_encoder_apply.5} parent=0 // pred_fallthru
    _
  // Predicated region
  $region38: #{gnn_encoder_apply.5} parent=0 // pred_check
    _
  $region39: #{gnn_encoder_apply.5} parent=0 // pred_check_branch
    %669 = sbr.rel (0) target = $region41
  $region40: #{gnn_encoder_apply.5} parent=0 // pred_region
    _
  $region41: #{gnn_encoder_apply.5} parent=0 // pred_fallthru
    _

// kernel: gnn_encoder_apply.6
$region0: #{gnn_encoder_apply.6}
  #allocation0 [shape = 'u32[]', space=smem, size = 0x4, offset = 0x4, fixed_abs, tag = 'smem constant byte address 0x4 - core index']
  #allocation1 [shape = 'u32[72,128]{1,0:T(1,128)}', space=vmem, size = 0x9000, scoped, tag = 'internal scratch']
  %s0 = inlined_call_operand.vmem [shape: bf16[128,128], index: 0, kind: input, shape index: {}]
  %s1 = inlined_call_operand.vmem [shape: bf16[128,256], index: 1, kind: input, shape index: {}]
  %s2 = inlined_call_operand.vmem [shape: f32[1,128], index: 2, kind: input, shape index: {}]
  %s3 = inlined_call_operand.vmem [shape: bf16[128,128], index: 3, kind: output, shape index: {0}]
  %s4 = inlined_call_operand.vmem [shape: f32[128,128], index: 4, kind: output, shape index: {1}]
  %5 = xla_tuple %s3, %s4
  %s6 = sld [smem:[#allocation0]]
  $region30: #{gnn_encoder_apply.6} parent=0
    _
  %s8 = ssub.s32 1, %s6
  %s9 = scalar_select 0, %s8, %s6
  // Predicated region
  $region2: #{gnn_encoder_apply.6} parent=0 // pred_check
    _
  $region3: #{gnn_encoder_apply.6} parent=0 // pred_check_branch
    %11 = sbr.rel (0) target = $region5
  $region4: #{gnn_encoder_apply.6} parent=0 // pred_region
    _
  $region5: #{gnn_encoder_apply.6} parent=0 // pred_fallthru
    _
  // Predicated region
  $region6: #{gnn_encoder_apply.6} parent=0 // pred_check
    _
  $region7: #{gnn_encoder_apply.6} parent=0 // pred_check_branch
    %13 = sbr.rel (0) target = $region9
  $region8: #{gnn_encoder_apply.6} parent=0 // pred_region
    _
  $region9: #{gnn_encoder_apply.6} parent=0 // pred_fallthru
    _
  // Predicated region
  $region10: #{gnn_encoder_apply.6} parent=0 // pred_check
    _
  $region11: #{gnn_encoder_apply.6} parent=0 // pred_check_branch
    %15 = sbr.rel (0) target = $region13
  $region12: #{gnn_encoder_apply.6} parent=0 // pred_region
    _
  $region13: #{gnn_encoder_apply.6} parent=0 // pred_fallthru
    _
  %v16 = vld [vmem:[%s0] sm:$0xf]
  %v17 = vld [vmem:[%s0 + $0x4] sm:$0xf]
  %v18 = vld [vmem:[%s0 + $0x8] sm:$0xf]
  %v19 = vld [vmem:[%s0 + $0xc] sm:$0xf]
  %v20 = vld [vmem:[%s0 + $0x10] sm:$0xf]
  %v21 = vld [vmem:[%s0 + $0x14] sm:$0xf]
  %v22 = vld [vmem:[%s0 + $0x18] sm:$0xf]
  %v23 = vld [vmem:[%s0 + $0x1c] sm:$0xf]
  %v24 = vld [vmem:[%s0 + $0x20] sm:$0xf]
  %v25 = vld [vmem:[%s0 + $0x24] sm:$0xf]
  %v26 = vld [vmem:[%s0 + $0x28] sm:$0xf]
  %v27 = vld [vmem:[%s0 + $0x2c] sm:$0xf]
  %v28 = vld [vmem:[%s0 + $0x30] sm:$0xf]
  %v29 = vld [vmem:[%s0 + $0x34] sm:$0xf]
  %v30 = vld [vmem:[%s0 + $0x38] sm:$0xf]
  %v31 = vld [vmem:[%s0 + $0x3c] sm:$0xf]
  %v32 = vld [vmem:[%s1] sm:$0xff]
  %v33 = vld [vmem:[%s1 + $0x8] sm:$0xff]
  %v34 = vld [vmem:[%s1 + $0x10] sm:$0xff]
  %v35 = vld [vmem:[%s1 + $0x18] sm:$0xff]
  %v36 = vld [vmem:[%s1 + $0x20] sm:$0xff]
  %v37 = vld [vmem:[%s1 + $0x28] sm:$0xff]
  %v38 = vld [vmem:[%s1 + $0x30] sm:$0xff]
  %v39 = vld [vmem:[%s1 + $0x38] sm:$0xff]
  %v40 = vld [vmem:[%s1 + $0x40] sm:$0xff]
  %v41 = vld [vmem:[%s1 + $0x48] sm:$0xff]
  %v42 = vld [vmem:[%s1 + $0x50] sm:$0xff]
  %v43 = vld [vmem:[%s1 + $0x58] sm:$0xff]
  %v44 = vld [vmem:[%s1 + $0x60] sm:$0xff]
  %v45 = vld [vmem:[%s1 + $0x68] sm:$0xff]
  %v46 = vld [vmem:[%s1 + $0x70] sm:$0xff]
  %v47 = vld [vmem:[%s1 + $0x78] sm:$0xff]
  %v64 = vunpack.c.l.b16 %v16
  %v65 = vunpack.c.l.b16 %v17
  %v66 = vunpack.c.l.b16 %v18
  %v67 = vunpack.c.l.b16 %v19
  %v68 = vunpack.c.l.b16 %v20
  %v69 = vunpack.c.l.b16 %v21
  %v70 = vunpack.c.l.b16 %v22
  %v71 = vunpack.c.l.b16 %v23
  %v72 = vunpack.c.l.b16 %v24
  %v73 = vunpack.c.l.b16 %v25
  %v74 = vunpack.c.l.b16 %v26
  %v75 = vunpack.c.l.b16 %v27
  %v76 = vunpack.c.l.b16 %v28
  %v77 = vunpack.c.l.b16 %v29
  %v78 = vunpack.c.l.b16 %v30
  %v79 = vunpack.c.l.b16 %v31
  %v80 = vpack.c.b16 %v65, %v64
  %v81 = vpack.c.b16 %v67, %v66
  %v82 = vpack.c.b16 %v69, %v68
  %v83 = vpack.c.b16 %v71, %v70
  %v84 = vpack.c.b16 %v73, %v72
  %v85 = vpack.c.b16 %v75, %v74
  %v86 = vpack.c.b16 %v77, %v76
  %v87 = vpack.c.b16 %v79, %v78
  %v112 = vunpack.c.l.b16 %v32
  %v113 = vunpack.c.h.b16 %v32
  %v114 = vunpack.c.l.b16 %v33
  %v115 = vunpack.c.h.b16 %v33
  %v116 = vunpack.c.l.b16 %v34
  %v117 = vunpack.c.h.b16 %v34
  %v118 = vunpack.c.l.b16 %v35
  %v119 = vunpack.c.h.b16 %v35
  %v120 = vunpack.c.l.b16 %v36
  %v121 = vunpack.c.h.b16 %v36
  %v122 = vunpack.c.l.b16 %v37
  %v123 = vunpack.c.h.b16 %v37
  %v124 = vunpack.c.l.b16 %v38
  %v125 = vunpack.c.h.b16 %v38
  %v126 = vunpack.c.l.b16 %v39
  %v127 = vunpack.c.h.b16 %v39
  %v128 = vunpack.c.l.b16 %v40
  %v129 = vunpack.c.h.b16 %v40
  %v130 = vunpack.c.l.b16 %v41
  %v131 = vunpack.c.h.b16 %v41
  %v132 = vunpack.c.l.b16 %v42
  %v133 = vunpack.c.h.b16 %v42
  %v134 = vunpack.c.l.b16 %v43
  %v135 = vunpack.c.h.b16 %v43
  %v136 = vunpack.c.l.b16 %v44
  %v137 = vunpack.c.h.b16 %v44
  %v138 = vunpack.c.l.b16 %v45
  %v139 = vunpack.c.h.b16 %v45
  %v140 = vunpack.c.l.b16 %v46
  %v141 = vunpack.c.h.b16 %v46
  %v142 = vunpack.c.l.b16 %v47
  %v143 = vunpack.c.h.b16 %v47
  %v144 = vpack.c.b16 %v114, %v112
  %v145 = vpack.c.b16 %v115, %v113
  %v146 = vpack.c.b16 %v118, %v116
  %v147 = vpack.c.b16 %v119, %v117
  %v148 = vpack.c.b16 %v122, %v120
  %v149 = vpack.c.b16 %v123, %v121
  %v150 = vpack.c.b16 %v126, %v124
  %v151 = vpack.c.b16 %v127, %v125
  %v152 = vpack.c.b16 %v130, %v128
  %v153 = vpack.c.b16 %v131, %v129
  %v154 = vpack.c.b16 %v134, %v132
  %v155 = vpack.c.b16 %v135, %v133
  %v156 = vpack.c.b16 %v138, %v136
  %v157 = vpack.c.b16 %v139, %v137
  %v158 = vpack.c.b16 %v142, %v140
  %v159 = vpack.c.b16 %v143, %v141
  %176 = vmatpush.bf16.msra.mxu0 %v158
  %177 = vmatpush.bf16.msra.mxu0 %v156
  %178 = vmatpush.bf16.msra.mxu0 %v154
  %179 = vmatpush.bf16.msra.mxu0 %v152
  %180 = vmatpush.bf16.msra.mxu0 %v150
  %181 = vmatpush.bf16.msra.mxu0 %v148
  %182 = vmatpush.bf16.msra.mxu0 %v146
  %183 = vmatpush.bf16.msra.mxu0 %v144
  %184 = vmatmul.bf16.gmra.mxu0 %v80
  %v185 = vpop.f32.mrf.mxu0
  %v186 = vadd.f32 0.0, %v185
  %v187 = vpop.f32.mrf.mxu0
  %v188 = vadd.f32 0.0, %v187
  %189 = vmatmul.bf16.gmra.mxu0 %v81
  %v190 = vpop.f32.mrf.mxu0
  %v191 = vadd.f32 0.0, %v190
  %v192 = vpop.f32.mrf.mxu0
  %v193 = vadd.f32 0.0, %v192
  %194 = vmatmul.bf16.gmra.mxu0 %v82
  %v195 = vpop.f32.mrf.mxu0
  %v196 = vadd.f32 0.0, %v195
  %v197 = vpop.f32.mrf.mxu0
  %v198 = vadd.f32 0.0, %v197
  %199 = vmatmul.bf16.gmra.mxu0 %v83
  %v200 = vpop.f32.mrf.mxu0
  %v201 = vadd.f32 0.0, %v200
  %v202 = vpop.f32.mrf.mxu0
  %v203 = vadd.f32 0.0, %v202
  %204 = vmatmul.bf16.gmra.mxu0 %v84
  %v205 = vpop.f32.mrf.mxu0
  %v206 = vadd.f32 0.0, %v205
  %v207 = vpop.f32.mrf.mxu0
  %v208 = vadd.f32 0.0, %v207
  %209 = vmatmul.bf16.gmra.mxu0 %v85
  %v210 = vpop.f32.mrf.mxu0
  %v211 = vadd.f32 0.0, %v210
  %v212 = vpop.f32.mrf.mxu0
  %v213 = vadd.f32 0.0, %v212
  %214 = vmatmul.bf16.gmra.mxu0 %v86
  %v215 = vpop.f32.mrf.mxu0
  %v216 = vadd.f32 0.0, %v215
  %v217 = vpop.f32.mrf.mxu0
  %v218 = vadd.f32 0.0, %v217
  %219 = vmatmul.bf16.gmra.mxu0 %v87
  %v220 = vpop.f32.mrf.mxu0
  %v221 = vadd.f32 0.0, %v220
  %v222 = vpop.f32.mrf.mxu0
  %v223 = vadd.f32 0.0, %v222
  %224 = vdwg.mxu0
  %225 = vmatpush.bf16.msra.mxu0 %v159
  %226 = vmatpush.bf16.msra.mxu0 %v157
  %227 = vmatpush.bf16.msra.mxu0 %v155
  %228 = vmatpush.bf16.msra.mxu0 %v153
  %229 = vmatpush.bf16.msra.mxu0 %v151
  %230 = vmatpush.bf16.msra.mxu0 %v149
  %231 = vmatpush.bf16.msra.mxu0 %v147
  %232 = vmatpush.bf16.msra.mxu0 %v145
  %233 = vmatmul.bf16.gmra.mxu0 %v80
  %v234 = vpop.f32.mrf.mxu0
  %v235 = vadd.f32 0.0, %v234
  %v236 = vpop.f32.mrf.mxu0
  %v237 = vadd.f32 0.0, %v236
  %238 = vmatmul.bf16.gmra.mxu0 %v81
  %v239 = vpop.f32.mrf.mxu0
  %v240 = vadd.f32 0.0, %v239
  %v241 = vpop.f32.mrf.mxu0
  %v242 = vadd.f32 0.0, %v241
  %243 = vmatmul.bf16.gmra.mxu0 %v82
  %v244 = vpop.f32.mrf.mxu0
  %v245 = vadd.f32 0.0, %v244
  %v246 = vpop.f32.mrf.mxu0
  %v247 = vadd.f32 0.0, %v246
  %248 = vmatmul.bf16.gmra.mxu0 %v83
  %v249 = vpop.f32.mrf.mxu0
  %v250 = vadd.f32 0.0, %v249
  %v251 = vpop.f32.mrf.mxu0
  %v252 = vadd.f32 0.0, %v251
  %253 = vmatmul.bf16.gmra.mxu0 %v84
  %v254 = vpop.f32.mrf.mxu0
  %v255 = vadd.f32 0.0, %v254
  %v256 = vpop.f32.mrf.mxu0
  %v257 = vadd.f32 0.0, %v256
  %258 = vmatmul.bf16.gmra.mxu0 %v85
  %v259 = vpop.f32.mrf.mxu0
  %v260 = vadd.f32 0.0, %v259
  %v261 = vpop.f32.mrf.mxu0
  %v262 = vadd.f32 0.0, %v261
  %263 = vmatmul.bf16.gmra.mxu0 %v86
  %v264 = vpop.f32.mrf.mxu0
  %v265 = vadd.f32 0.0, %v264
  %v266 = vpop.f32.mrf.mxu0
  %v267 = vadd.f32 0.0, %v266
  %268 = vmatmul.bf16.gmra.mxu0 %v87
  %v269 = vpop.f32.mrf.mxu0
  %v270 = vadd.f32 0.0, %v269
  %v271 = vpop.f32.mrf.mxu0
  %v272 = vadd.f32 0.0, %v271
  %273 = vdwg.mxu0
  %v274 = vpack.c.bf16 %v186, %v186
  %v275 = vpack.c.bf16 %v188, %v188
  %v276 = vpack.c.bf16 %v191, %v191
  %v277 = vpack.c.bf16 %v193, %v193
  %v278 = vpack.c.bf16 %v196, %v196
  %v279 = vpack.c.bf16 %v198, %v198
  %v280 = vpack.c.bf16 %v201, %v201
  %v281 = vpack.c.bf16 %v203, %v203
  %v282 = vpack.c.bf16 %v206, %v206
  %v283 = vpack.c.bf16 %v208, %v208
  %v284 = vpack.c.bf16 %v211, %v211
  %v285 = vpack.c.bf16 %v213, %v213
  %v286 = vpack.c.bf16 %v216, %v216
  %v287 = vpack.c.bf16 %v218, %v218
  %v288 = vpack.c.bf16 %v221, %v221
  %v289 = vpack.c.bf16 %v223, %v223
  %290 = vst [vmem:[%s3] sm:$0xf] %v274
  %291 = vst [vmem:[%s3 + $0x4] sm:$0xf] %v275
  %292 = vst [vmem:[%s3 + $0x8] sm:$0xf] %v276
  %293 = vst [vmem:[%s3 + $0xc] sm:$0xf] %v277
  %294 = vst [vmem:[%s3 + $0x10] sm:$0xf] %v278
  %295 = vst [vmem:[%s3 + $0x14] sm:$0xf] %v279
  %296 = vst [vmem:[%s3 + $0x18] sm:$0xf] %v280
  %297 = vst [vmem:[%s3 + $0x1c] sm:$0xf] %v281
  %298 = vst [vmem:[%s3 + $0x20] sm:$0xf] %v282
  %299 = vst [vmem:[%s3 + $0x24] sm:$0xf] %v283
  %300 = vst [vmem:[%s3 + $0x28] sm:$0xf] %v284
  %301 = vst [vmem:[%s3 + $0x2c] sm:$0xf] %v285
  %302 = vst [vmem:[%s3 + $0x30] sm:$0xf] %v286
  %303 = vst [vmem:[%s3 + $0x34] sm:$0xf] %v287
  %304 = vst [vmem:[%s3 + $0x38] sm:$0xf] %v288
  %305 = vst [vmem:[%s3 + $0x3c] sm:$0xf] %v289
  %v306 = vld [vmem:[%s2] sm:$0x1]
  %v308 = vperm.slane %v306, 0
  %v310 = vadd.f32 %v235, %v308
  %v311 = vadd.f32 %v237, %v308
  %v312 = vadd.f32 %v240, %v308
  %v313 = vadd.f32 %v242, %v308
  %v314 = vadd.f32 %v245, %v308
  %v315 = vadd.f32 %v247, %v308
  %v316 = vadd.f32 %v250, %v308
  %v317 = vadd.f32 %v252, %v308
  %v318 = vadd.f32 %v255, %v308
  %v319 = vadd.f32 %v257, %v308
  %v320 = vadd.f32 %v260, %v308
  %v321 = vadd.f32 %v262, %v308
  %v322 = vadd.f32 %v265, %v308
  %v323 = vadd.f32 %v267, %v308
  %v324 = vadd.f32 %v270, %v308
  %v325 = vadd.f32 %v272, %v308
  %326 = vst [vmem:[%s4] sm:$0xff] %v310
  %327 = vst [vmem:[%s4 + $0x8] sm:$0xff] %v311
  %328 = vst [vmem:[%s4 + $0x10] sm:$0xff] %v312
  %329 = vst [vmem:[%s4 + $0x18] sm:$0xff] %v313
  %330 = vst [vmem:[%s4 + $0x20] sm:$0xff] %v314
  %331 = vst [vmem:[%s4 + $0x28] sm:$0xff] %v315
  %332 = vst [vmem:[%s4 + $0x30] sm:$0xff] %v316
  %333 = vst [vmem:[%s4 + $0x38] sm:$0xff] %v317
  %334 = vst [vmem:[%s4 + $0x40] sm:$0xff] %v318
  %335 = vst [vmem:[%s4 + $0x48] sm:$0xff] %v319
  %336 = vst [vmem:[%s4 + $0x50] sm:$0xff] %v320
  %337 = vst [vmem:[%s4 + $0x58] sm:$0xff] %v321
  %338 = vst [vmem:[%s4 + $0x60] sm:$0xff] %v322
  %339 = vst [vmem:[%s4 + $0x68] sm:$0xff] %v323
  %340 = vst [vmem:[%s4 + $0x70] sm:$0xff] %v324
  %341 = vst [vmem:[%s4 + $0x78] sm:$0xff] %v325
  // Predicated region
  $region14: #{gnn_encoder_apply.6} parent=0 // pred_check
    _
  $region15: #{gnn_encoder_apply.6} parent=0 // pred_check_branch
    %343 = sbr.rel (0) target = $region17
  $region16: #{gnn_encoder_apply.6} parent=0 // pred_region
    _
  $region17: #{gnn_encoder_apply.6} parent=0 // pred_fallthru
    _
  // Predicated region
  $region18: #{gnn_encoder_apply.6} parent=0 // pred_check
    _
  $region19: #{gnn_encoder_apply.6} parent=0 // pred_check_branch
    %345 = sbr.rel (0) target = $region21
  $region20: #{gnn_encoder_apply.6} parent=0 // pred_region
    _
  $region21: #{gnn_encoder_apply.6} parent=0 // pred_fallthru
    _
  // Predicated region
  $region22: #{gnn_encoder_apply.6} parent=0 // pred_check
    _
  $region23: #{gnn_encoder_apply.6} parent=0 // pred_check_branch
    %347 = sbr.rel (0) target = $region25
  $region24: #{gnn_encoder_apply.6} parent=0 // pred_region
    _
  $region25: #{gnn_encoder_apply.6} parent=0 // pred_fallthru
    _
  // Predicated region
  $region26: #{gnn_encoder_apply.6} parent=0 // pred_check
    _
  $region27: #{gnn_encoder_apply.6} parent=0 // pred_check_branch
    %349 = sbr.rel (0) target = $region29
  $region28: #{gnn_encoder_apply.6} parent=0 // pred_region
    _
  $region29: #{gnn_encoder_apply.6} parent=0 // pred_fallthru
    _

// kernel: gnn_encoder_apply.7
$region0: #{gnn_encoder_apply.7}
  #allocation0 [shape = 'u32[]', space=smem, size = 0x4, offset = 0x4, fixed_abs, tag = 'smem constant byte address 0x4 - core index']
  #allocation1 [shape = 'u32[72,128]{1,0:T(1,128)}', space=vmem, size = 0x9000, scoped, tag = 'internal scratch']
  #allocation2 [shape = 'f32[128,128]{1,0:T(8,128)}', space=vmem, size = 0x10000, scoped, tag = 'scratch operand']
  #allocation3 [shape = 's32[1]{0}', space=sflag, size = 0x4, scoped, tag = 'scoped memory for gnn_encoder_apply.7']
  #allocation4 [shape = 's32[1]{0:T(128)S(6)}', space=smem, size = 0x200, scoped, tag = 'prefetched SMEM operand 0']
  #allocation5 [shape = 's32[1]{0:T(128)S(6)}', space=smem, size = 0x200, scoped, tag = 'prefetched SMEM operand 1']
  %s0 = inlined_call_operand.<no memory space> [shape: s32[1], index: 0, kind: input, shape index: {}]
  %s1 = inlined_call_operand.<no memory space> [shape: s32[1], index: 1, kind: input, shape index: {}]
  %s2 = inlined_call_operand.vmem [shape: s8[128,128], index: 2, kind: input, shape index: {}]
  %s3 = inlined_call_operand.vmem [shape: bf16[128,128], index: 3, kind: input, shape index: {}]
  %s4 = inlined_call_operand.vmem [shape: f32[128,128], index: 4, kind: input, shape index: {}]
  %s5 = inlined_call_operand.vmem [shape: f32[1,128], index: 5, kind: input, shape index: {}]
  %s6 = inlined_call_operand.vmem [shape: f32[1,128], index: 6, kind: input, shape index: {}]
  %s7 = inlined_call_operand.vmem [shape: f32[128,128], index: 7, kind: output, shape index: {}]
  %s8 = sld [smem:[#allocation0]]
  $region42: #{gnn_encoder_apply.7} parent=0
    _
  %s10 = ssub.s32 1, %s8
  %s11 = scalar_select 0, %s10, %s8
  %12 = sst [smem:[#allocation4]] %s0
  %13 = sst [smem:[#allocation5]] %s1
  // Predicated region
  $region2: #{gnn_encoder_apply.7} parent=0 // pred_check
    _
  $region3: #{gnn_encoder_apply.7} parent=0 // pred_check_branch
    %15 = sbr.rel (0) target = $region5
  $region4: #{gnn_encoder_apply.7} parent=0 // pred_region
    %s16 = sadd.s32 0, 0
    %s17 = sld [smem:[#allocation4 + %s16]]
    %p18 = scmp.lt.s32.totalorder %s17, 0
    %s19 = scalar_select %p18, %s17, 0
    %s20 = smul.addr %s19, 8
    %s21 = scalar_lea.vmem %s2, %s20
    %s22 = sadd.s32 0, 0
    %s23 = sld [smem:[#allocation4 + %s22]]
  $region5: #{gnn_encoder_apply.7} parent=0 // pred_fallthru
    _
  // Predicated region
  $region6: #{gnn_encoder_apply.7} parent=0 // pred_check
    _
  $region7: #{gnn_encoder_apply.7} parent=0 // pred_check_branch
    %25 = sbr.rel (0) target = $region9
  $region8: #{gnn_encoder_apply.7} parent=0 // pred_region
    %s26 = sadd.s32 0, 0
    %s27 = sld [smem:[#allocation4 + %s26]]
    %s28 = smul.u32 16, %s27
    %p29 = scmp.lt.s32.totalorder %s28, 15
    %s30 = scalar_select %p29, %s28, 15
    %s31 = smul.addr %s30, 4
    %s32 = scalar_lea.vmem %s3, %s31
    %s33 = sadd.s32 0, 0
    %s34 = sld [smem:[#allocation4 + %s33]]
    %s35 = smul.u32 16, %s34
  $region9: #{gnn_encoder_apply.7} parent=0 // pred_fallthru
    _
  // Predicated region
  $region10: #{gnn_encoder_apply.7} parent=0 // pred_check
    _
  $region11: #{gnn_encoder_apply.7} parent=0 // pred_check_branch
    %37 = sbr.rel (0) target = $region13
  $region12: #{gnn_encoder_apply.7} parent=0 // pred_region
    _
  $region13: #{gnn_encoder_apply.7} parent=0 // pred_fallthru
    _
  // Predicated region
  $region14: #{gnn_encoder_apply.7} parent=0 // pred_check
    _
  $region15: #{gnn_encoder_apply.7} parent=0 // pred_check_branch
    %39 = sbr.rel (0) target = $region17
  $region16: #{gnn_encoder_apply.7} parent=0 // pred_region
    _
  $region17: #{gnn_encoder_apply.7} parent=0 // pred_fallthru
    _
  // Predicated region
  $region18: #{gnn_encoder_apply.7} parent=0 // pred_check
    _
  $region19: #{gnn_encoder_apply.7} parent=0 // pred_check_branch
    %41 = sbr.rel (0) target = $region21
  $region20: #{gnn_encoder_apply.7} parent=0 // pred_region
    _
  $region21: #{gnn_encoder_apply.7} parent=0 // pred_fallthru
    _
  %s42 = sadd.s32 0, 0
  %s43 = sld [smem:[#allocation4 + %s42]]
  %p44 = scmp.lt.s32.totalorder %s43, 0
  %s45 = scalar_select %p44, %s43, 0
  %s46 = smul.addr %s45, 8
  %s47 = scalar_lea.vmem %s2, %s46
  %s48 = sadd.s32 0, 0
  %s49 = sld [smem:[#allocation4 + %s48]]
  %s50 = smul.u32 16, %s49
  %p51 = scmp.lt.s32.totalorder %s50, 15
  %s52 = scalar_select %p51, %s50, 15
  %s53 = smul.addr %s52, 4
  %s54 = scalar_lea.vmem %s3, %s53
  %s55 = sadd.s32 0, 0
  %s56 = sld [smem:[#allocation4 + %s55]]
  %p57 = scmp.lt.s32.totalorder %s56, 0
  %s58 = scalar_select %p57, %s56, 0
  %s59 = smul.addr %s58, 8
  %s60 = scalar_lea.vmem %s2, %s59
  %s61 = sadd.s32 0, 0
  %s62 = sld [smem:[#allocation4 + %s61]]
  %s63 = sadd.s32 0, 0
  %s64 = sld [smem:[#allocation4 + %s63]]
  %s65 = smul.u32 16, %s64
  %p66 = scmp.lt.s32.totalorder %s65, 15
  %s67 = scalar_select %p66, %s65, 15
  %s68 = smul.addr %s67, 4
  %s69 = scalar_lea.vmem %s3, %s68
  %s70 = sadd.s32 0, 0
  %s71 = sld [smem:[#allocation4 + %s70]]
  %s72 = smul.u32 16, %s71
  %p73 = scmp.eq.s32.totalorder 0, 0
  // Predicated region
  $region22: #{gnn_encoder_apply.7} parent=0 // pred_check
    %p74 = pneg %p73
  $region23: #{gnn_encoder_apply.7} parent=0 // pred_check_branch
    %76 = sbr.rel (%p74) target = $region25
  $region24: #{gnn_encoder_apply.7} parent=0 // pred_region
    %v77 = vld [vmem:[%s4] sm:$0xff]
    %v78 = vld [vmem:[%s4 + $0x8] sm:$0xff]
    %v79 = vld [vmem:[%s4 + $0x10] sm:$0xff]
    %v80 = vld [vmem:[%s4 + $0x18] sm:$0xff]
    %v81 = vld [vmem:[%s4 + $0x20] sm:$0xff]
    %v82 = vld [vmem:[%s4 + $0x28] sm:$0xff]
    %v83 = vld [vmem:[%s4 + $0x30] sm:$0xff]
    %v84 = vld [vmem:[%s4 + $0x38] sm:$0xff]
    %v85 = vld [vmem:[%s4 + $0x40] sm:$0xff]
    %v86 = vld [vmem:[%s4 + $0x48] sm:$0xff]
    %v87 = vld [vmem:[%s4 + $0x50] sm:$0xff]
    %v88 = vld [vmem:[%s4 + $0x58] sm:$0xff]
    %v89 = vld [vmem:[%s4 + $0x60] sm:$0xff]
    %v90 = vld [vmem:[%s4 + $0x68] sm:$0xff]
    %v91 = vld [vmem:[%s4 + $0x70] sm:$0xff]
    %v92 = vld [vmem:[%s4 + $0x78] sm:$0xff]
    %93 = vst [vmem:[#allocation2] sm:$0xff] %v77
    %94 = vst [vmem:[#allocation2 + $0x8] sm:$0xff] %v78
    %95 = vst [vmem:[#allocation2 + $0x10] sm:$0xff] %v79
    %96 = vst [vmem:[#allocation2 + $0x18] sm:$0xff] %v80
    %97 = vst [vmem:[#allocation2 + $0x20] sm:$0xff] %v81
    %98 = vst [vmem:[#allocation2 + $0x28] sm:$0xff] %v82
    %99 = vst [vmem:[#allocation2 + $0x30] sm:$0xff] %v83
    %100 = vst [vmem:[#allocation2 + $0x38] sm:$0xff] %v84
    %101 = vst [vmem:[#allocation2 + $0x40] sm:$0xff] %v85
    %102 = vst [vmem:[#allocation2 + $0x48] sm:$0xff] %v86
    %103 = vst [vmem:[#allocation2 + $0x50] sm:$0xff] %v87
    %104 = vst [vmem:[#allocation2 + $0x58] sm:$0xff] %v88
    %105 = vst [vmem:[#allocation2 + $0x60] sm:$0xff] %v89
    %106 = vst [vmem:[#allocation2 + $0x68] sm:$0xff] %v90
    %107 = vst [vmem:[#allocation2 + $0x70] sm:$0xff] %v91
    %108 = vst [vmem:[#allocation2 + $0x78] sm:$0xff] %v92
  $region25: #{gnn_encoder_apply.7} parent=0 // pred_fallthru
    _
  %s109 = sld [smem:[#allocation5]]
  %p110 = scmp.lt.s32.totalorder 0, %s109
  // Predicated region
  $region26: #{gnn_encoder_apply.7} parent=0 // pred_check
    %p111 = pneg %p110
  $region27: #{gnn_encoder_apply.7} parent=0 // pred_check_branch
    %113 = sbr.rel (%p111) target = $region29
  $region28: #{gnn_encoder_apply.7} parent=0 // pred_region
    %v114 = vld [vmem:[%s60] sm:$0xff]
    %v115 = vld [vmem:[%s60 + $0x8] sm:$0xff]
    %v116 = vld [vmem:[%s60 + $0x10] sm:$0xff]
    %v117 = vld [vmem:[%s60 + $0x18] sm:$0xff]
    %v118 = vunpack.c.0.s8 %v114
    %v119 = vunpack.c.1.s8 %v114
    %v120 = vunpack.c.2.s8 %v114
    %v121 = vunpack.c.3.s8 %v114
    %v122 = vunpack.c.0.s8 %v115
    %v123 = vunpack.c.1.s8 %v115
    %v124 = vunpack.c.2.s8 %v115
    %v125 = vunpack.c.3.s8 %v115
    %v126 = vunpack.c.0.s8 %v116
    %v127 = vunpack.c.1.s8 %v116
    %v128 = vunpack.c.2.s8 %v116
    %v129 = vunpack.c.3.s8 %v116
    %v130 = vunpack.c.0.s8 %v117
    %v131 = vunpack.c.1.s8 %v117
    %v132 = vunpack.c.2.s8 %v117
    %v133 = vunpack.c.3.s8 %v117
    %v134 = vcvt.s32.f32 %v118
    %v135 = vcvt.s32.f32 %v119
    %v136 = vcvt.s32.f32 %v120
    %v137 = vcvt.s32.f32 %v121
    %v138 = vcvt.s32.f32 %v122
    %v139 = vcvt.s32.f32 %v123
    %v140 = vcvt.s32.f32 %v124
    %v141 = vcvt.s32.f32 %v125
    %v142 = vcvt.s32.f32 %v126
    %v143 = vcvt.s32.f32 %v127
    %v144 = vcvt.s32.f32 %v128
    %v145 = vcvt.s32.f32 %v129
    %v146 = vcvt.s32.f32 %v130
    %v147 = vcvt.s32.f32 %v131
    %v148 = vcvt.s32.f32 %v132
    %v149 = vcvt.s32.f32 %v133
    %v150 = vpack.c.bf16 %v135, %v134
    %v151 = vpack.c.bf16 %v137, %v136
    %v152 = vpack.c.bf16 %v139, %v138
    %v153 = vpack.c.bf16 %v141, %v140
    %v154 = vpack.c.bf16 %v143, %v142
    %v155 = vpack.c.bf16 %v145, %v144
    %v156 = vpack.c.bf16 %v147, %v146
    %v157 = vpack.c.bf16 %v149, %v148
    %v158 = vld [vmem:[#allocation2] sm:$0xff]
    %v159 = vld [vmem:[#allocation2 + $0x8] sm:$0xff]
    %v160 = vld [vmem:[#allocation2 + $0x10] sm:$0xff]
    %v161 = vld [vmem:[#allocation2 + $0x18] sm:$0xff]
    %v162 = vld [vmem:[#allocation2 + $0x20] sm:$0xff]
    %v163 = vld [vmem:[#allocation2 + $0x28] sm:$0xff]
    %v164 = vld [vmem:[#allocation2 + $0x30] sm:$0xff]
    %v165 = vld [vmem:[#allocation2 + $0x38] sm:$0xff]
    %v166 = vld [vmem:[#allocation2 + $0x40] sm:$0xff]
    %v167 = vld [vmem:[#allocation2 + $0x48] sm:$0xff]
    %v168 = vld [vmem:[#allocation2 + $0x50] sm:$0xff]
    %v169 = vld [vmem:[#allocation2 + $0x58] sm:$0xff]
    %v170 = vld [vmem:[#allocation2 + $0x60] sm:$0xff]
    %v171 = vld [vmem:[#allocation2 + $0x68] sm:$0xff]
    %v172 = vld [vmem:[#allocation2 + $0x70] sm:$0xff]
    %v173 = vld [vmem:[#allocation2 + $0x78] sm:$0xff]
    %v174 = vld [vmem:[%s69] sm:$0xf]
    %v175 = vld [vmem:[%s69 + $0x4] sm:$0xf]
    %v176 = vld [vmem:[%s69 + $0x8] sm:$0xf]
    %v177 = vld [vmem:[%s69 + $0xc] sm:$0xf]
    %v178 = vld [vmem:[%s69 + $0x10] sm:$0xf]
    %v179 = vld [vmem:[%s69 + $0x14] sm:$0xf]
    %v180 = vld [vmem:[%s69 + $0x18] sm:$0xf]
    %v181 = vld [vmem:[%s69 + $0x1c] sm:$0xf]
    %v182 = vld [vmem:[%s69 + $0x20] sm:$0xf]
    %v183 = vld [vmem:[%s69 + $0x24] sm:$0xf]
    %v184 = vld [vmem:[%s69 + $0x28] sm:$0xf]
    %v185 = vld [vmem:[%s69 + $0x2c] sm:$0xf]
    %v186 = vld [vmem:[%s69 + $0x30] sm:$0xf]
    %v187 = vld [vmem:[%s69 + $0x34] sm:$0xf]
    %v188 = vld [vmem:[%s69 + $0x38] sm:$0xf]
    %v189 = vld [vmem:[%s69 + $0x3c] sm:$0xf]
    %v206 = vunpack.c.l.b16 %v174
    %v207 = vunpack.c.l.b16 %v175
    %v208 = vunpack.c.l.b16 %v176
    %v209 = vunpack.c.l.b16 %v177
    %v210 = vunpack.c.l.b16 %v178
    %v211 = vunpack.c.l.b16 %v179
    %v212 = vunpack.c.l.b16 %v180
    %v213 = vunpack.c.l.b16 %v181
    %v214 = vunpack.c.l.b16 %v182
    %v215 = vunpack.c.l.b16 %v183
    %v216 = vunpack.c.l.b16 %v184
    %v217 = vunpack.c.l.b16 %v185
    %v218 = vunpack.c.l.b16 %v186
    %v219 = vunpack.c.l.b16 %v187
    %v220 = vunpack.c.l.b16 %v188
    %v221 = vunpack.c.l.b16 %v189
    %v222 = vpack.c.b16 %v207, %v206
    %v223 = vpack.c.b16 %v209, %v208
    %v224 = vpack.c.b16 %v211, %v210
    %v225 = vpack.c.b16 %v213, %v212
    %v226 = vpack.c.b16 %v215, %v214
    %v227 = vpack.c.b16 %v217, %v216
    %v228 = vpack.c.b16 %v219, %v218
    %v229 = vpack.c.b16 %v221, %v220
    %238 = vmatpush.bf16.msra.mxu0 %v229
    %239 = vmatpush.bf16.msra.mxu0 %v228
    %240 = vmatpush.bf16.msra.mxu0 %v227
    %241 = vmatpush.bf16.msra.mxu0 %v226
    %242 = vmatpush.bf16.msra.mxu0 %v225
    %243 = vmatpush.bf16.msra.mxu0 %v224
    %244 = vmatpush.bf16.msra.mxu0 %v223
    %245 = vmatpush.bf16.msra.mxu0 %v222
    %246 = vmatmul.bf16.gmra.mxu0 %v150
    %v247 = vpop.f32.mrf.mxu0
    %v248 = vadd.f32 0.0, %v247
    %v249 = vpop.f32.mrf.mxu0
    %v250 = vadd.f32 0.0, %v249
    %251 = vmatmul.bf16.gmra.mxu0 %v151
    %v252 = vpop.f32.mrf.mxu0
    %v253 = vadd.f32 0.0, %v252
    %v254 = vpop.f32.mrf.mxu0
    %v255 = vadd.f32 0.0, %v254
    %256 = vmatmul.bf16.gmra.mxu0 %v152
    %v257 = vpop.f32.mrf.mxu0
    %v258 = vadd.f32 0.0, %v257
    %v259 = vpop.f32.mrf.mxu0
    %v260 = vadd.f32 0.0, %v259
    %261 = vmatmul.bf16.gmra.mxu0 %v153
    %v262 = vpop.f32.mrf.mxu0
    %v263 = vadd.f32 0.0, %v262
    %v264 = vpop.f32.mrf.mxu0
    %v265 = vadd.f32 0.0, %v264
    %266 = vmatmul.bf16.gmra.mxu0 %v154
    %v267 = vpop.f32.mrf.mxu0
    %v268 = vadd.f32 0.0, %v267
    %v269 = vpop.f32.mrf.mxu0
    %v270 = vadd.f32 0.0, %v269
    %271 = vmatmul.bf16.gmra.mxu0 %v155
    %v272 = vpop.f32.mrf.mxu0
    %v273 = vadd.f32 0.0, %v272
    %v274 = vpop.f32.mrf.mxu0
    %v275 = vadd.f32 0.0, %v274
    %276 = vmatmul.bf16.gmra.mxu0 %v156
    %v277 = vpop.f32.mrf.mxu0
    %v278 = vadd.f32 0.0, %v277
    %v279 = vpop.f32.mrf.mxu0
    %v280 = vadd.f32 0.0, %v279
    %281 = vmatmul.bf16.gmra.mxu0 %v157
    %v282 = vpop.f32.mrf.mxu0
    %v283 = vadd.f32 0.0, %v282
    %v284 = vpop.f32.mrf.mxu0
    %v285 = vadd.f32 0.0, %v284
    %286 = vdwg.mxu0
    %v287 = vadd.f32 %v158, %v248
    %v288 = vadd.f32 %v159, %v250
    %v289 = vadd.f32 %v160, %v253
    %v290 = vadd.f32 %v161, %v255
    %v291 = vadd.f32 %v162, %v258
    %v292 = vadd.f32 %v163, %v260
    %v293 = vadd.f32 %v164, %v263
    %v294 = vadd.f32 %v165, %v265
    %v295 = vadd.f32 %v166, %v268
    %v296 = vadd.f32 %v167, %v270
    %v297 = vadd.f32 %v168, %v273
    %v298 = vadd.f32 %v169, %v275
    %v299 = vadd.f32 %v170, %v278
    %v300 = vadd.f32 %v171, %v280
    %v301 = vadd.f32 %v172, %v283
    %v302 = vadd.f32 %v173, %v285
    %303 = vst [vmem:[#allocation2] sm:$0xff] %v287
    %304 = vst [vmem:[#allocation2 + $0x8] sm:$0xff] %v288
    %305 = vst [vmem:[#allocation2 + $0x10] sm:$0xff] %v289
    %306 = vst [vmem:[#allocation2 + $0x18] sm:$0xff] %v290
    %307 = vst [vmem:[#allocation2 + $0x20] sm:$0xff] %v291
    %308 = vst [vmem:[#allocation2 + $0x28] sm:$0xff] %v292
    %309 = vst [vmem:[#allocation2 + $0x30] sm:$0xff] %v293
    %310 = vst [vmem:[#allocation2 + $0x38] sm:$0xff] %v294
    %311 = vst [vmem:[#allocation2 + $0x40] sm:$0xff] %v295
    %312 = vst [vmem:[#allocation2 + $0x48] sm:$0xff] %v296
    %313 = vst [vmem:[#allocation2 + $0x50] sm:$0xff] %v297
    %314 = vst [vmem:[#allocation2 + $0x58] sm:$0xff] %v298
    %315 = vst [vmem:[#allocation2 + $0x60] sm:$0xff] %v299
    %316 = vst [vmem:[#allocation2 + $0x68] sm:$0xff] %v300
    %317 = vst [vmem:[#allocation2 + $0x70] sm:$0xff] %v301
    %318 = vst [vmem:[#allocation2 + $0x78] sm:$0xff] %v302
  $region29: #{gnn_encoder_apply.7} parent=0 // pred_fallthru
    _
  // Predicated region
  $region30: #{gnn_encoder_apply.7} parent=0 // pred_check
    %p319 = pneg %p73
  $region31: #{gnn_encoder_apply.7} parent=0 // pred_check_branch
    %321 = sbr.rel (%p319) target = $region33
  $region32: #{gnn_encoder_apply.7} parent=0 // pred_region
    %v322 = vld [vmem:[#allocation2] sm:$0xff]
    %v323 = vld [vmem:[#allocation2 + $0x8] sm:$0xff]
    %v324 = vld [vmem:[#allocation2 + $0x10] sm:$0xff]
    %v325 = vld [vmem:[#allocation2 + $0x18] sm:$0xff]
    %v326 = vld [vmem:[#allocation2 + $0x20] sm:$0xff]
    %v327 = vld [vmem:[#allocation2 + $0x28] sm:$0xff]
    %v328 = vld [vmem:[#allocation2 + $0x30] sm:$0xff]
    %v329 = vld [vmem:[#allocation2 + $0x38] sm:$0xff]
    %v330 = vld [vmem:[#allocation2 + $0x40] sm:$0xff]
    %v331 = vld [vmem:[#allocation2 + $0x48] sm:$0xff]
    %v332 = vld [vmem:[#allocation2 + $0x50] sm:$0xff]
    %v333 = vld [vmem:[#allocation2 + $0x58] sm:$0xff]
    %v334 = vld [vmem:[#allocation2 + $0x60] sm:$0xff]
    %v335 = vld [vmem:[#allocation2 + $0x68] sm:$0xff]
    %v336 = vld [vmem:[#allocation2 + $0x70] sm:$0xff]
    %v337 = vld [vmem:[#allocation2 + $0x78] sm:$0xff]
    %v338 = vmul.f32 %v322, %v322
    %v339 = vmul.f32 %v323, %v323
    %v340 = vmul.f32 %v324, %v324
    %v341 = vmul.f32 %v325, %v325
    %v342 = vmul.f32 %v326, %v326
    %v343 = vmul.f32 %v327, %v327
    %v344 = vmul.f32 %v328, %v328
    %v345 = vmul.f32 %v329, %v329
    %v346 = vmul.f32 %v330, %v330
    %v347 = vmul.f32 %v331, %v331
    %v348 = vmul.f32 %v332, %v332
    %v349 = vmul.f32 %v333, %v333
    %v350 = vmul.f32 %v334, %v334
    %v351 = vmul.f32 %v335, %v335
    %v352 = vmul.f32 %v336, %v336
    %v353 = vmul.f32 %v337, %v337
    %354 = vadd.xlane.f32.xlu0 %v338
    %v355 = vpop.xlane.xlu0 %354
    %356 = vadd.xlane.f32.xlu0 %v339
    %v357 = vpop.xlane.xlu0 %356
    %358 = vadd.xlane.f32.xlu0 %v340
    %v359 = vpop.xlane.xlu0 %358
    %360 = vadd.xlane.f32.xlu0 %v341
    %v361 = vpop.xlane.xlu0 %360
    %362 = vadd.xlane.f32.xlu0 %v342
    %v363 = vpop.xlane.xlu0 %362
    %364 = vadd.xlane.f32.xlu0 %v343
    %v365 = vpop.xlane.xlu0 %364
    %366 = vadd.xlane.f32.xlu0 %v344
    %v367 = vpop.xlane.xlu0 %366
    %368 = vadd.xlane.f32.xlu0 %v345
    %v369 = vpop.xlane.xlu0 %368
    %370 = vadd.xlane.f32.xlu0 %v346
    %v371 = vpop.xlane.xlu0 %370
    %372 = vadd.xlane.f32.xlu0 %v347
    %v373 = vpop.xlane.xlu0 %372
    %374 = vadd.xlane.f32.xlu0 %v348
    %v375 = vpop.xlane.xlu0 %374
    %376 = vadd.xlane.f32.xlu0 %v349
    %v377 = vpop.xlane.xlu0 %376
    %378 = vadd.xlane.f32.xlu0 %v350
    %v379 = vpop.xlane.xlu0 %378
    %380 = vadd.xlane.f32.xlu0 %v351
    %v381 = vpop.xlane.xlu0 %380
    %382 = vadd.xlane.f32.xlu0 %v352
    %v383 = vpop.xlane.xlu0 %382
    %384 = vadd.xlane.f32.xlu0 %v353
    %v385 = vpop.xlane.xlu0 %384
    %v386 = vmax.f32 %v355, 1e-24
    %v387 = vmax.f32 %v357, 1e-24
    %v388 = vmax.f32 %v359, 1e-24
    %v389 = vmax.f32 %v361, 1e-24
    %v390 = vmax.f32 %v363, 1e-24
    %v391 = vmax.f32 %v365, 1e-24
    %v392 = vmax.f32 %v367, 1e-24
    %v393 = vmax.f32 %v369, 1e-24
    %v394 = vmax.f32 %v371, 1e-24
    %v395 = vmax.f32 %v373, 1e-24
    %v396 = vmax.f32 %v375, 1e-24
    %v397 = vmax.f32 %v377, 1e-24
    %v398 = vmax.f32 %v379, 1e-24
    %v399 = vmax.f32 %v381, 1e-24
    %v400 = vmax.f32 %v383, 1e-24
    %v401 = vmax.f32 %v385, 1e-24
    %v402 = vrsqrt.pop %v386
    %v403 = vmul.f32 %v402, %v386
    %v404 = vmul.f32 %v403, %v402
    %v405 = vmul.f32 0.5, %v404
    %v406 = vsub.f32 1.5, %v405
    %v407 = vmul.f32 %v402, %v406
    %vm408 = vweird.f32 %v386
    %vm409 = vweird.f32 %v402
    %vm410 = vmor %vm408, %vm409
    %v411 = vsel %vm410, %v402, %v407
    %v412 = vrsqrt.pop %v387
    %v413 = vmul.f32 %v412, %v387
    %v414 = vmul.f32 %v413, %v412
    %v415 = vmul.f32 0.5, %v414
    %v416 = vsub.f32 1.5, %v415
    %v417 = vmul.f32 %v412, %v416
    %vm418 = vweird.f32 %v387
    %vm419 = vweird.f32 %v412
    %vm420 = vmor %vm418, %vm419
    %v421 = vsel %vm420, %v412, %v417
    %v422 = vrsqrt.pop %v388
    %v423 = vmul.f32 %v422, %v388
    %v424 = vmul.f32 %v423, %v422
    %v425 = vmul.f32 0.5, %v424
    %v426 = vsub.f32 1.5, %v425
    %v427 = vmul.f32 %v422, %v426
    %vm428 = vweird.f32 %v388
    %vm429 = vweird.f32 %v422
    %vm430 = vmor %vm428, %vm429
    %v431 = vsel %vm430, %v422, %v427
    %v432 = vrsqrt.pop %v389
    %v433 = vmul.f32 %v432, %v389
    %v434 = vmul.f32 %v433, %v432
    %v435 = vmul.f32 0.5, %v434
    %v436 = vsub.f32 1.5, %v435
    %v437 = vmul.f32 %v432, %v436
    %vm438 = vweird.f32 %v389
    %vm439 = vweird.f32 %v432
    %vm440 = vmor %vm438, %vm439
    %v441 = vsel %vm440, %v432, %v437
    %v442 = vrsqrt.pop %v390
    %v443 = vmul.f32 %v442, %v390
    %v444 = vmul.f32 %v443, %v442
    %v445 = vmul.f32 0.5, %v444
    %v446 = vsub.f32 1.5, %v445
    %v447 = vmul.f32 %v442, %v446
    %vm448 = vweird.f32 %v390
    %vm449 = vweird.f32 %v442
    %vm450 = vmor %vm448, %vm449
    %v451 = vsel %vm450, %v442, %v447
    %v452 = vrsqrt.pop %v391
    %v453 = vmul.f32 %v452, %v391
    %v454 = vmul.f32 %v453, %v452
    %v455 = vmul.f32 0.5, %v454
    %v456 = vsub.f32 1.5, %v455
    %v457 = vmul.f32 %v452, %v456
    %vm458 = vweird.f32 %v391
    %vm459 = vweird.f32 %v452
    %vm460 = vmor %vm458, %vm459
    %v461 = vsel %vm460, %v452, %v457
    %v462 = vrsqrt.pop %v392
    %v463 = vmul.f32 %v462, %v392
    %v464 = vmul.f32 %v463, %v462
    %v465 = vmul.f32 0.5, %v464
    %v466 = vsub.f32 1.5, %v465
    %v467 = vmul.f32 %v462, %v466
    %vm468 = vweird.f32 %v392
    %vm469 = vweird.f32 %v462
    %vm470 = vmor %vm468, %vm469
    %v471 = vsel %vm470, %v462, %v467
    %v472 = vrsqrt.pop %v393
    %v473 = vmul.f32 %v472, %v393
    %v474 = vmul.f32 %v473, %v472
    %v475 = vmul.f32 0.5, %v474
    %v476 = vsub.f32 1.5, %v475
    %v477 = vmul.f32 %v472, %v476
    %vm478 = vweird.f32 %v393
    %vm479 = vweird.f32 %v472
    %vm480 = vmor %vm478, %vm479
    %v481 = vsel %vm480, %v472, %v477
    %v482 = vrsqrt.pop %v394
    %v483 = vmul.f32 %v482, %v394
    %v484 = vmul.f32 %v483, %v482
    %v485 = vmul.f32 0.5, %v484
    %v486 = vsub.f32 1.5, %v485
    %v487 = vmul.f32 %v482, %v486
    %vm488 = vweird.f32 %v394
    %vm489 = vweird.f32 %v482
    %vm490 = vmor %vm488, %vm489
    %v491 = vsel %vm490, %v482, %v487
    %v492 = vrsqrt.pop %v395
    %v493 = vmul.f32 %v492, %v395
    %v494 = vmul.f32 %v493, %v492
    %v495 = vmul.f32 0.5, %v494
    %v496 = vsub.f32 1.5, %v495
    %v497 = vmul.f32 %v492, %v496
    %vm498 = vweird.f32 %v395
    %vm499 = vweird.f32 %v492
    %vm500 = vmor %vm498, %vm499
    %v501 = vsel %vm500, %v492, %v497
    %v502 = vrsqrt.pop %v396
    %v503 = vmul.f32 %v502, %v396
    %v504 = vmul.f32 %v503, %v502
    %v505 = vmul.f32 0.5, %v504
    %v506 = vsub.f32 1.5, %v505
    %v507 = vmul.f32 %v502, %v506
    %vm508 = vweird.f32 %v396
    %vm509 = vweird.f32 %v502
    %vm510 = vmor %vm508, %vm509
    %v511 = vsel %vm510, %v502, %v507
    %v512 = vrsqrt.pop %v397
    %v513 = vmul.f32 %v512, %v397
    %v514 = vmul.f32 %v513, %v512
    %v515 = vmul.f32 0.5, %v514
    %v516 = vsub.f32 1.5, %v515
    %v517 = vmul.f32 %v512, %v516
    %vm518 = vweird.f32 %v397
    %vm519 = vweird.f32 %v512
    %vm520 = vmor %vm518, %vm519
    %v521 = vsel %vm520, %v512, %v517
    %v522 = vrsqrt.pop %v398
    %v523 = vmul.f32 %v522, %v398
    %v524 = vmul.f32 %v523, %v522
    %v525 = vmul.f32 0.5, %v524
    %v526 = vsub.f32 1.5, %v525
    %v527 = vmul.f32 %v522, %v526
    %vm528 = vweird.f32 %v398
    %vm529 = vweird.f32 %v522
    %vm530 = vmor %vm528, %vm529
    %v531 = vsel %vm530, %v522, %v527
    %v532 = vrsqrt.pop %v399
    %v533 = vmul.f32 %v532, %v399
    %v534 = vmul.f32 %v533, %v532
    %v535 = vmul.f32 0.5, %v534
    %v536 = vsub.f32 1.5, %v535
    %v537 = vmul.f32 %v532, %v536
    %vm538 = vweird.f32 %v399
    %vm539 = vweird.f32 %v532
    %vm540 = vmor %vm538, %vm539
    %v541 = vsel %vm540, %v532, %v537
    %v542 = vrsqrt.pop %v400
    %v543 = vmul.f32 %v542, %v400
    %v544 = vmul.f32 %v543, %v542
    %v545 = vmul.f32 0.5, %v544
    %v546 = vsub.f32 1.5, %v545
    %v547 = vmul.f32 %v542, %v546
    %vm548 = vweird.f32 %v400
    %vm549 = vweird.f32 %v542
    %vm550 = vmor %vm548, %vm549
    %v551 = vsel %vm550, %v542, %v547
    %v552 = vrsqrt.pop %v401
    %v553 = vmul.f32 %v552, %v401
    %v554 = vmul.f32 %v553, %v552
    %v555 = vmul.f32 0.5, %v554
    %v556 = vsub.f32 1.5, %v555
    %v557 = vmul.f32 %v552, %v556
    %vm558 = vweird.f32 %v401
    %vm559 = vweird.f32 %v552
    %vm560 = vmor %vm558, %vm559
    %v561 = vsel %vm560, %v552, %v557
    %v562 = vmul.f32 %v322, %v411
    %v563 = vmul.f32 %v323, %v421
    %v564 = vmul.f32 %v324, %v431
    %v565 = vmul.f32 %v325, %v441
    %v566 = vmul.f32 %v326, %v451
    %v567 = vmul.f32 %v327, %v461
    %v568 = vmul.f32 %v328, %v471
    %v569 = vmul.f32 %v329, %v481
    %v570 = vmul.f32 %v330, %v491
    %v571 = vmul.f32 %v331, %v501
    %v572 = vmul.f32 %v332, %v511
    %v573 = vmul.f32 %v333, %v521
    %v574 = vmul.f32 %v334, %v531
    %v575 = vmul.f32 %v335, %v541
    %v576 = vmul.f32 %v336, %v551
    %v577 = vmul.f32 %v337, %v561
    %v578 = vld [vmem:[%s5] sm:$0x1]
    %v580 = vperm.slane %v578, 0
    %v582 = vmul.f32 %v562, %v580
    %v583 = vmul.f32 %v563, %v580
    %v584 = vmul.f32 %v564, %v580
    %v585 = vmul.f32 %v565, %v580
    %v586 = vmul.f32 %v566, %v580
    %v587 = vmul.f32 %v567, %v580
    %v588 = vmul.f32 %v568, %v580
    %v589 = vmul.f32 %v569, %v580
    %v590 = vmul.f32 %v570, %v580
    %v591 = vmul.f32 %v571, %v580
    %v592 = vmul.f32 %v572, %v580
    %v593 = vmul.f32 %v573, %v580
    %v594 = vmul.f32 %v574, %v580
    %v595 = vmul.f32 %v575, %v580
    %v596 = vmul.f32 %v576, %v580
    %v597 = vmul.f32 %v577, %v580
    %v598 = vld [vmem:[%s6] sm:$0x1]
    %v600 = vperm.slane %v598, 0
    %v602 = vadd.f32 %v582, %v600
    %v603 = vadd.f32 %v583, %v600
    %v604 = vadd.f32 %v584, %v600
    %v605 = vadd.f32 %v585, %v600
    %v606 = vadd.f32 %v586, %v600
    %v607 = vadd.f32 %v587, %v600
    %v608 = vadd.f32 %v588, %v600
    %v609 = vadd.f32 %v589, %v600
    %v610 = vadd.f32 %v590, %v600
    %v611 = vadd.f32 %v591, %v600
    %v612 = vadd.f32 %v592, %v600
    %v613 = vadd.f32 %v593, %v600
    %v614 = vadd.f32 %v594, %v600
    %v615 = vadd.f32 %v595, %v600
    %v616 = vadd.f32 %v596, %v600
    %v617 = vadd.f32 %v597, %v600
    %618 = vst [vmem:[%s7] sm:$0xff] %v602
    %619 = vst [vmem:[%s7 + $0x8] sm:$0xff] %v603
    %620 = vst [vmem:[%s7 + $0x10] sm:$0xff] %v604
    %621 = vst [vmem:[%s7 + $0x18] sm:$0xff] %v605
    %622 = vst [vmem:[%s7 + $0x20] sm:$0xff] %v606
    %623 = vst [vmem:[%s7 + $0x28] sm:$0xff] %v607
    %624 = vst [vmem:[%s7 + $0x30] sm:$0xff] %v608
    %625 = vst [vmem:[%s7 + $0x38] sm:$0xff] %v609
    %626 = vst [vmem:[%s7 + $0x40] sm:$0xff] %v610
    %627 = vst [vmem:[%s7 + $0x48] sm:$0xff] %v611
    %628 = vst [vmem:[%s7 + $0x50] sm:$0xff] %v612
    %629 = vst [vmem:[%s7 + $0x58] sm:$0xff] %v613
    %630 = vst [vmem:[%s7 + $0x60] sm:$0xff] %v614
    %631 = vst [vmem:[%s7 + $0x68] sm:$0xff] %v615
    %632 = vst [vmem:[%s7 + $0x70] sm:$0xff] %v616
    %633 = vst [vmem:[%s7 + $0x78] sm:$0xff] %v617
  $region33: #{gnn_encoder_apply.7} parent=0 // pred_fallthru
    _
  // Predicated region
  $region34: #{gnn_encoder_apply.7} parent=0 // pred_check
    _
  $region35: #{gnn_encoder_apply.7} parent=0 // pred_check_branch
    %635 = sbr.rel (0) target = $region37
  $region36: #{gnn_encoder_apply.7} parent=0 // pred_region
    _
  $region37: #{gnn_encoder_apply.7} parent=0 // pred_fallthru
    _
  // Predicated region
  $region38: #{gnn_encoder_apply.7} parent=0 // pred_check
    _
  $region39: #{gnn_encoder_apply.7} parent=0 // pred_check_branch
    %637 = sbr.rel (0) target = $region41
  $region40: #{gnn_encoder_apply.7} parent=0 // pred_region
    _
  $region41: #{gnn_encoder_apply.7} parent=0 // pred_fallthru
    _

</llo_original>
